<compile_context>
chip_gen: v6e
topology: v6e:2x2x1
jax: 0.10.0
libtpu: 0.0.40
codegen_flags: <defaults>
</compile_context>

<pallas_src>
import jax
import jax.numpy as jnp
from jax.experimental import pallas as pl
from jax.experimental.pallas import tpu as pltpu

SUB, LANE = 8, 128


def seq2seq_fused_kernel(tok_ref, emb_ref, wih_ref, b_ref, whh_ref, wdec_ref,
                         bdec_ref, out_ref):
    """Whole forward pass in one kernel invocation (everything VMEM-resident).

    tok_ref  : (T*Bp, 1)  int32  time-major, batch-padded token ids (row = t*Bp + b)
    emb_ref  : (VocP, E)  bf16   embedding table, vocab padded to a lane multiple
    wih_ref  : (E, 4H)    bf16   input-to-hidden weights (pre-transposed)
    b_ref    : (1, 4H)    f32    b_ih + b_hh
    whh_ref  : (H, 4H)    bf16   hidden-to-hidden weights (pre-transposed)
    wdec_ref : (H, Vp)    bf16   decoder weights (pre-transposed, lane-padded)
    bdec_ref : (1, Vp)    f32    decoder bias (lane-padded)
    out_ref  : (T, Bp, Vp) f32   logits, time-major, lane-dense
    """
    T, Bp, Vp = out_ref.shape
    H = whh_ref.shape[0]
    TBp = T * Bp
    vocab_p = emb_ref.shape[0]

    # (1) Fused embedding gather: one-hot(tokens) @ table is an exact row gather on the MXU.
    tok = tok_ref[...]                                                    # (T*Bp, 1) int32
    vocab_iota = jax.lax.broadcasted_iota(jnp.int32, (TBp, vocab_p), 1)   # (T*Bp, VocP)
    onehot = jnp.where(tok == vocab_iota, 1.0, 0.0).astype(jnp.bfloat16)
    x_all = jnp.dot(onehot, emb_ref[...],
                    preferred_element_type=jnp.float32)                   # (T*Bp, E) gathered rows

    # (2) Batched input projection for ALL time steps: one MXU matmul (bf16 in, f32 acc),
    #     hoisted off the serial critical path.
    gates_x = (jnp.dot(x_all.astype(jnp.bfloat16), wih_ref[...],
                       preferred_element_type=jnp.float32)
               + b_ref[...])                                              # (T*Bp, 4H) f32

    # (3) Serial LSTM recurrence with the per-step decoder matmul interleaved: the
    #     [Bp,H]@[H,Vp] decoder push hides behind the next step's EUP/VPU gate work.
    whh = whh_ref[...]
    wdec = wdec_ref[...]
    bdec = bdec_ref[...]
    h = jnp.zeros((Bp, H), jnp.float32)
    c = jnp.zeros((Bp, H), jnp.float32)
    # T is a small static constant -> full unroll.
    # TODO(synk): for long T switch to lax.fori_loop(..., unroll=True) reading gates_x /
    # writing out_ref through pl.ds slices, to bound compile time and vreg live ranges.
    # TODO(synk): if a bundle dump shows per-step vmatmul RHS pushes dominating, keep W_hh
    # resident via pltpu.matmul_push_rhs / matmul_acc_lhs / matmul_pop.
    for t in range(T):
        g_t = (gates_x[t * Bp:(t + 1) * Bp, :]                            # static, sublane-aligned
               + jnp.dot(h.astype(jnp.bfloat16), whh,
                         preferred_element_type=jnp.float32))             # (Bp, 4H) f32
        # PyTorch nn.LSTM gate order (i, f, g, o); H % 128 == 0 keeps slices lane-aligned.
        i_g = jax.nn.sigmoid(g_t[:, 0 * H:1 * H])
        f_g = jax.nn.sigmoid(g_t[:, 1 * H:2 * H])
        g_g = jnp.tanh(g_t[:, 2 * H:3 * H])
        o_g = jax.nn.sigmoid(g_t[:, 3 * H:4 * H])
        c = f_g * c + i_g * g_g
        h = o_g * jnp.tanh(c)
        logits_t = (jnp.dot(h.astype(jnp.bfloat16), wdec,
                            preferred_element_type=jnp.float32) + bdec)   # (Bp, Vp) f32
        out_ref[t] = logits_t.astype(out_ref.dtype)                       # full-tile, lane-dense store


def seq2seq_forward(token_ids, kparams, char_vocab_size):
    """token_ids: int32 [B, T]  ->  logits float32 [B, T, char_vocab_size]."""
    emb = kparams["embedding"]          # (VocP, E)  bf16
    w_ih_t = kparams["w_ih_t"]          # (E, 4H)    bf16
    b = kparams["b"]                    # (1, 4H)    f32
    w_hh_t = kparams["w_hh_t"]          # (H, 4H)    bf16
    w_dec = kparams["w_dec"]            # (H, Vp)    bf16
    b_dec = kparams["b_dec"]            # (1, Vp)    f32

    B, T = token_ids.shape
    H = w_hh_t.shape[0]
    Vp = w_dec.shape[1]
    assert H % LANE == 0, "hidden_dim must be a multiple of 128 for lane-aligned gate slices"

    Bp = max(SUB, ((B + SUB - 1) // SUB) * SUB)      # pad batch to a sublane multiple

    # Only per-call glue: reshuffle the tiny (B, T) int32 id array into the time-major padded
    # column layout (one small fused XLA op); the embedded / hidden / logit float slabs never
    # round-trip HBM outside the kernel.
    tok_p = jnp.pad(token_ids.astype(jnp.int32), ((0, Bp - B), (0, 0)))   # (Bp, T)
    tok_col = jnp.transpose(tok_p, (1, 0)).reshape(T * Bp, 1)             # row = t*Bp + b

    vmem = pl.BlockSpec(memory_space=pltpu.MemorySpace.VMEM)              # whole-array, VMEM-resident
    # TODO(synk): at realistic sizes (large vocab / long T / big B) add a vocab-tile and/or
    # batch-tile grid with dimension_semantics=("parallel", ...) and vmem_limit_bytes headroom
    # (v7x has only 64 MiB VMEM); at these shapes a single gridless call is latency-optimal.
    out3d = pl.pallas_call(
        seq2seq_fused_kernel,
        out_shape=jax.ShapeDtypeStruct((T, Bp, Vp), jnp.float32),
        in_specs=[vmem] * 7,
        out_specs=vmem,
    )(tok_col, emb, w_ih_t, b, w_hh_t, w_dec, b_dec)

    # Single small epilogue: slice away batch/vocab padding and go back to batch_first.
    return jnp.transpose(out3d[:, :B, :char_vocab_size], (1, 0, 2))


def reference_forward(token_ids, params):
    """Pure-JAX f32 reference (matches PyTorch Embedding/LSTM/Linear semantics)."""
    emb = params["embedding"][token_ids]
    B = token_ids.shape[0]
    H = params["w_hh_t"].shape[0]

    def step(carry, x_t):
        h, c = carry
        gates = x_t @ params["w_ih_t"] + h @ params["w_hh_t"] + params["b"][0]
        i, f, g, o = jnp.split(gates, 4, axis=-1)
        i = jax.nn.sigmoid(i)
        f = jax.nn.sigmoid(f)
        g = jnp.tanh(g)
        o = jax.nn.sigmoid(o)
        c = f * c + i * g
        h = o * jnp.tanh(c)
        return (h, c), h

    h0 = jnp.zeros((B, H), jnp.float32)
    c0 = jnp.zeros((B, H), jnp.float32)
    _, hs = jax.lax.scan(step, (h0, c0), jnp.transpose(emb, (1, 0, 2)))
    hs = jnp.transpose(hs, (1, 0, 2))               # [B, T, H]
    return hs @ params["w_dec"] + params["b_dec"][0]


def make_params(key, vocab_size, char_vocab_size, embedding_dim, hidden_dim):
    """Deterministic synthetic f32 parameters (shapes follow the nn.Module, pre-transposed)."""
    ks = jax.random.split(key, 7)
    s = 0.1
    emb = jax.random.normal(ks[0], (vocab_size, embedding_dim), jnp.float32) * s
    # PyTorch stores weight_ih_l0 as [4H, E]; we pre-transpose to [E, 4H].
    w_ih_t = jax.random.normal(ks[1], (embedding_dim, 4 * hidden_dim), jnp.float32) * s
    w_hh_t = jax.random.normal(ks[2], (hidden_dim, 4 * hidden_dim), jnp.float32) * s
    b_ih = jax.random.normal(ks[3], (4 * hidden_dim,), jnp.float32) * s
    b_hh = jax.random.normal(ks[4], (4 * hidden_dim,), jnp.float32) * s
    # nn.Linear weight is [V, H]; we pre-transpose to [H, V].
    w_dec = jax.random.normal(ks[5], (hidden_dim, char_vocab_size), jnp.float32) * s
    b_dec = jax.random.normal(ks[6], (char_vocab_size,), jnp.float32) * s
    return {
        "embedding": emb,
        "w_ih_t": w_ih_t,
        "w_hh_t": w_hh_t,
        "b": (b_ih + b_hh).reshape(1, 4 * hidden_dim),
        "w_dec": w_dec,
        "b_dec": b_dec.reshape(1, char_vocab_size),
    }


def prepare_kernel_params(params):
    """One-time prep (outside the per-call path): pad vocab dims to lane multiples and cast
    MXU operands to bf16.  Biases stay f32 (added after f32 accumulation)."""
    vocab, _ = params["embedding"].shape
    V = params["w_dec"].shape[1]
    vocab_p = ((vocab + LANE - 1) // LANE) * LANE
    Vp = ((V + LANE - 1) // LANE) * LANE
    return {
        "embedding": jnp.pad(params["embedding"],
                             ((0, vocab_p - vocab), (0, 0))).astype(jnp.bfloat16),
        "w_ih_t": params["w_ih_t"].astype(jnp.bfloat16),
        "w_hh_t": params["w_hh_t"].astype(jnp.bfloat16),
        "b": params["b"],
        "w_dec": jnp.pad(params["w_dec"], ((0, 0), (0, Vp - V))).astype(jnp.bfloat16),
        "b_dec": jnp.pad(params["b_dec"], ((0, 0), (0, Vp - V))),
    }


if __name__ == "__main__":
    # Small shapes consistent with the module's forward:
    B, T = 2, 8
    vocab_size, char_vocab_size = 50, 40
    embedding_dim, hidden_dim = 32, 128   # H multiple of 128 keeps gate slices lane-aligned

    key = jax.random.PRNGKey(0)
    k_par, k_tok = jax.random.split(key)
    params = make_params(k_par, vocab_size, char_vocab_size, embedding_dim, hidden_dim)
    kparams = prepare_kernel_params(params)
    token_ids = jax.random.randint(k_tok, (B, T), 0, vocab_size, dtype=jnp.int32)

    out = seq2seq_forward(token_ids, kparams, char_vocab_size)
    out = jax.block_until_ready(out)

    ref = reference_forward(token_ids, params)
    assert out.shape == (B, T, char_vocab_size), out.shape
    # bf16 MXU operands (f32 accumulate, f32 elementwise) vs the all-f32 reference.
    assert jnp.allclose(out, ref, rtol=2e-2, atol=2e-2), float(jnp.max(jnp.abs(out - ref)))

    print("KERNEL_OK")
</pallas_src>

<mosaic_0001>
module attributes {stable_mosaic.version = 11 : i64} {
  func.func @seq2seq_fused_kernel(%arg0: memref<64x1xi32, #tpu.memory_space<vmem>>, %arg1: memref<128x32xbf16, #tpu.memory_space<vmem>>, %arg2: memref<32x512xbf16, #tpu.memory_space<vmem>>, %arg3: memref<1x512xf32, #tpu.memory_space<vmem>>, %arg4: memref<128x512xbf16, #tpu.memory_space<vmem>>, %arg5: memref<128x128xbf16, #tpu.memory_space<vmem>>, %arg6: memref<1x128xf32, #tpu.memory_space<vmem>>, %arg7: memref<8x8x128xf32, #tpu.memory_space<vmem>>) attributes {dimension_semantics = [], scalar_prefetch = 0 : i64, scratch_operands = 0 : i64, tpu.core_type = #tpu.core_type<tc>} {
    %c0 = arith.constant 0 : index
    %c0_0 = arith.constant 0 : index
    %0 = vector.load %arg0[%c0, %c0_0] : memref<64x1xi32, #tpu.memory_space<vmem>>, vector<64x1xi32>
    %1 = tpu.iota {dimensions = array<i32: 1>} : vector<64x128xi32>
    %2 = vector.broadcast %0 : vector<64x1xi32> to vector<64x128xi32>
    %3 = arith.cmpi eq, %2, %1 : vector<64x128xi32>
    %cst = arith.constant 1.000000e+00 : f32
    %cst_1 = arith.constant 0.000000e+00 : f32
    %4 = vector.broadcast %cst : f32 to vector<64x128xf32>
    %5 = vector.broadcast %cst_1 : f32 to vector<64x128xf32>
    %6 = arith.select %3, %4, %5 : vector<64x128xi1>, vector<64x128xf32>
    %7 = arith.truncf %6 : vector<64x128xf32> to vector<64x128xbf16>
    %c0_2 = arith.constant 0 : index
    %c0_3 = arith.constant 0 : index
    %8 = vector.load %arg1[%c0_2, %c0_3] : memref<128x32xbf16, #tpu.memory_space<vmem>>, vector<128x32xbf16>
    %cst_4 = arith.constant dense<0.000000e+00> : vector<64x32xf32>
    %9 = tpu.matmul %7, %8, %cst_4 {dimension_numbers = #tpu.dot_dimension_numbers<[1], [0], [0], [1], [0, 0, 1, 1], [], []>} : vector<64x128xbf16>, vector<128x32xbf16>, vector<64x32xf32> -> vector<64x32xf32>
    %10 = arith.truncf %9 : vector<64x32xf32> to vector<64x32xbf16>
    %c0_5 = arith.constant 0 : index
    %c0_6 = arith.constant 0 : index
    %11 = vector.load %arg2[%c0_5, %c0_6] : memref<32x512xbf16, #tpu.memory_space<vmem>>, vector<32x512xbf16>
    %cst_7 = arith.constant dense<0.000000e+00> : vector<64x512xf32>
    %12 = tpu.matmul %10, %11, %cst_7 {dimension_numbers = #tpu.dot_dimension_numbers<[1], [0], [0], [1], [0, 0, 1, 1], [], []>} : vector<64x32xbf16>, vector<32x512xbf16>, vector<64x512xf32> -> vector<64x512xf32>
    %c0_8 = arith.constant 0 : index
    %c0_9 = arith.constant 0 : index
    %13 = vector.load %arg3[%c0_8, %c0_9] : memref<1x512xf32, #tpu.memory_space<vmem>>, vector<1x512xf32>
    %14 = vector.broadcast %13 : vector<1x512xf32> to vector<64x512xf32>
    %15 = arith.addf %12, %14 : vector<64x512xf32>
    %c0_10 = arith.constant 0 : index
    %c0_11 = arith.constant 0 : index
    %16 = vector.load %arg4[%c0_10, %c0_11] : memref<128x512xbf16, #tpu.memory_space<vmem>>, vector<128x512xbf16>
    %c0_12 = arith.constant 0 : index
    %c0_13 = arith.constant 0 : index
    %17 = vector.load %arg5[%c0_12, %c0_13] : memref<128x128xbf16, #tpu.memory_space<vmem>>, vector<128x128xbf16>
    %c0_14 = arith.constant 0 : index
    %c0_15 = arith.constant 0 : index
    %18 = vector.load %arg6[%c0_14, %c0_15] : memref<1x128xf32, #tpu.memory_space<vmem>>, vector<1x128xf32>
    %cst_16 = arith.constant 0.000000e+00 : f32
    %19 = vector.broadcast %cst_16 : f32 to vector<8x128xf32>
    %cst_17 = arith.constant 0.000000e+00 : f32
    %20 = vector.broadcast %cst_17 : f32 to vector<8x128xf32>
    %21 = vector.extract_strided_slice %15 {offsets = [0, 0], sizes = [8, 512], strides = [1, 1]} : vector<64x512xf32> to vector<8x512xf32>
    %22 = arith.truncf %19 : vector<8x128xf32> to vector<8x128xbf16>
    %cst_18 = arith.constant dense<0.000000e+00> : vector<8x512xf32>
    %23 = tpu.matmul %22, %16, %cst_18 {dimension_numbers = #tpu.dot_dimension_numbers<[1], [0], [0], [1], [0, 0, 1, 1], [], []>} : vector<8x128xbf16>, vector<128x512xbf16>, vector<8x512xf32> -> vector<8x512xf32>
    %24 = arith.addf %21, %23 : vector<8x512xf32>
    %25 = vector.extract_strided_slice %24 {offsets = [0, 0], sizes = [8, 128], strides = [1, 1]} : vector<8x512xf32> to vector<8x128xf32>
    %26 = arith.negf %25 : vector<8x128xf32>
    %27 = math.exp %26 : vector<8x128xf32>
    %cst_19 = arith.constant 1.000000e+00 : f32
    %28 = vector.broadcast %cst_19 : f32 to vector<8x128xf32>
    %29 = arith.addf %28, %27 : vector<8x128xf32>
    %30 = arith.divf %28, %29 : vector<8x128xf32>
    %31 = vector.extract_strided_slice %24 {offsets = [0, 128], sizes = [8, 128], strides = [1, 1]} : vector<8x512xf32> to vector<8x128xf32>
    %32 = arith.negf %31 : vector<8x128xf32>
    %33 = math.exp %32 : vector<8x128xf32>
    %cst_20 = arith.constant 1.000000e+00 : f32
    %34 = vector.broadcast %cst_20 : f32 to vector<8x128xf32>
    %35 = arith.addf %34, %33 : vector<8x128xf32>
    %36 = arith.divf %34, %35 : vector<8x128xf32>
    %37 = vector.extract_strided_slice %24 {offsets = [0, 256], sizes = [8, 128], strides = [1, 1]} : vector<8x512xf32> to vector<8x128xf32>
    %38 = math.tanh %37 : vector<8x128xf32>
    %39 = vector.extract_strided_slice %24 {offsets = [0, 384], sizes = [8, 128], strides = [1, 1]} : vector<8x512xf32> to vector<8x128xf32>
    %40 = arith.negf %39 : vector<8x128xf32>
    %41 = math.exp %40 : vector<8x128xf32>
    %cst_21 = arith.constant 1.000000e+00 : f32
    %42 = vector.broadcast %cst_21 : f32 to vector<8x128xf32>
    %43 = arith.addf %42, %41 : vector<8x128xf32>
    %44 = arith.divf %42, %43 : vector<8x128xf32>
    %45 = arith.mulf %36, %20 : vector<8x128xf32>
    %46 = arith.mulf %30, %38 : vector<8x128xf32>
    %47 = arith.addf %45, %46 : vector<8x128xf32>
    %48 = math.tanh %47 : vector<8x128xf32>
    %49 = arith.mulf %44, %48 : vector<8x128xf32>
    %50 = arith.truncf %49 : vector<8x128xf32> to vector<8x128xbf16>
    %cst_22 = arith.constant dense<0.000000e+00> : vector<8x128xf32>
    %51 = tpu.matmul %50, %17, %cst_22 {dimension_numbers = #tpu.dot_dimension_numbers<[1], [0], [0], [1], [0, 0, 1, 1], [], []>} : vector<8x128xbf16>, vector<128x128xbf16>, vector<8x128xf32> -> vector<8x128xf32>
    %52 = vector.broadcast %18 : vector<1x128xf32> to vector<8x128xf32>
    %53 = arith.addf %51, %52 : vector<8x128xf32>
    %c0_23 = arith.constant 0 : index
    %c0_24 = arith.constant 0 : index
    %c0_25 = arith.constant 0 : index
    %54 = vector.load %arg7[%c0_23, %c0_24, %c0_25] : memref<8x8x128xf32, #tpu.memory_space<vmem>>, vector<1x8x128xf32>
    %55 = vector.shape_cast %54 : vector<1x8x128xf32> to vector<8x128xf32>
    %56 = vector.shape_cast %53 : vector<8x128xf32> to vector<1x8x128xf32>
    tpu.vector_store %arg7[%c0_23, %c0_24, %c0_25], %56 {strides = array<i32>} : memref<8x8x128xf32, #tpu.memory_space<vmem>>, vector<1x8x128xf32>,
    %57 = vector.extract_strided_slice %15 {offsets = [8, 0], sizes = [8, 512], strides = [1, 1]} : vector<64x512xf32> to vector<8x512xf32>
    %58 = arith.truncf %49 : vector<8x128xf32> to vector<8x128xbf16>
    %cst_26 = arith.constant dense<0.000000e+00> : vector<8x512xf32>
    %59 = tpu.matmul %58, %16, %cst_26 {dimension_numbers = #tpu.dot_dimension_numbers<[1], [0], [0], [1], [0, 0, 1, 1], [], []>} : vector<8x128xbf16>, vector<128x512xbf16>, vector<8x512xf32> -> vector<8x512xf32>
    %60 = arith.addf %57, %59 : vector<8x512xf32>
    %61 = vector.extract_strided_slice %60 {offsets = [0, 0], sizes = [8, 128], strides = [1, 1]} : vector<8x512xf32> to vector<8x128xf32>
    %62 = arith.negf %61 : vector<8x128xf32>
    %63 = math.exp %62 : vector<8x128xf32>
    %cst_27 = arith.constant 1.000000e+00 : f32
    %64 = vector.broadcast %cst_27 : f32 to vector<8x128xf32>
    %65 = arith.addf %64, %63 : vector<8x128xf32>
    %66 = arith.divf %64, %65 : vector<8x128xf32>
    %67 = vector.extract_strided_slice %60 {offsets = [0, 128], sizes = [8, 128], strides = [1, 1]} : vector<8x512xf32> to vector<8x128xf32>
    %68 = arith.negf %67 : vector<8x128xf32>
    %69 = math.exp %68 : vector<8x128xf32>
    %cst_28 = arith.constant 1.000000e+00 : f32
    %70 = vector.broadcast %cst_28 : f32 to vector<8x128xf32>
    %71 = arith.addf %70, %69 : vector<8x128xf32>
    %72 = arith.divf %70, %71 : vector<8x128xf32>
    %73 = vector.extract_strided_slice %60 {offsets = [0, 256], sizes = [8, 128], strides = [1, 1]} : vector<8x512xf32> to vector<8x128xf32>
    %74 = math.tanh %73 : vector<8x128xf32>
    %75 = vector.extract_strided_slice %60 {offsets = [0, 384], sizes = [8, 128], strides = [1, 1]} : vector<8x512xf32> to vector<8x128xf32>
    %76 = arith.negf %75 : vector<8x128xf32>
    %77 = math.exp %76 : vector<8x128xf32>
    %cst_29 = arith.constant 1.000000e+00 : f32
    %78 = vector.broadcast %cst_29 : f32 to vector<8x128xf32>
    %79 = arith.addf %78, %77 : vector<8x128xf32>
    %80 = arith.divf %78, %79 : vector<8x128xf32>
    %81 = arith.mulf %72, %47 : vector<8x128xf32>
    %82 = arith.mulf %66, %74 : vector<8x128xf32>
    %83 = arith.addf %81, %82 : vector<8x128xf32>
    %84 = math.tanh %83 : vector<8x128xf32>
    %85 = arith.mulf %80, %84 : vector<8x128xf32>
    %86 = arith.truncf %85 : vector<8x128xf32> to vector<8x128xbf16>
    %cst_30 = arith.constant dense<0.000000e+00> : vector<8x128xf32>
    %87 = tpu.matmul %86, %17, %cst_30 {dimension_numbers = #tpu.dot_dimension_numbers<[1], [0], [0], [1], [0, 0, 1, 1], [], []>} : vector<8x128xbf16>, vector<128x128xbf16>, vector<8x128xf32> -> vector<8x128xf32>
    %88 = vector.broadcast %18 : vector<1x128xf32> to vector<8x128xf32>
    %89 = arith.addf %87, %88 : vector<8x128xf32>
    %c1 = arith.constant 1 : index
    %c0_31 = arith.constant 0 : index
    %c0_32 = arith.constant 0 : index
    %90 = vector.load %arg7[%c1, %c0_31, %c0_32] : memref<8x8x128xf32, #tpu.memory_space<vmem>>, vector<1x8x128xf32>
    %91 = vector.shape_cast %90 : vector<1x8x128xf32> to vector<8x128xf32>
    %92 = vector.shape_cast %89 : vector<8x128xf32> to vector<1x8x128xf32>
    tpu.vector_store %arg7[%c1, %c0_31, %c0_32], %92 {strides = array<i32>} : memref<8x8x128xf32, #tpu.memory_space<vmem>>, vector<1x8x128xf32>,
    %93 = vector.extract_strided_slice %15 {offsets = [16, 0], sizes = [8, 512], strides = [1, 1]} : vector<64x512xf32> to vector<8x512xf32>
    %94 = arith.truncf %85 : vector<8x128xf32> to vector<8x128xbf16>
    %cst_33 = arith.constant dense<0.000000e+00> : vector<8x512xf32>
    %95 = tpu.matmul %94, %16, %cst_33 {dimension_numbers = #tpu.dot_dimension_numbers<[1], [0], [0], [1], [0, 0, 1, 1], [], []>} : vector<8x128xbf16>, vector<128x512xbf16>, vector<8x512xf32> -> vector<8x512xf32>
    %96 = arith.addf %93, %95 : vector<8x512xf32>
    %97 = vector.extract_strided_slice %96 {offsets = [0, 0], sizes = [8, 128], strides = [1, 1]} : vector<8x512xf32> to vector<8x128xf32>
    %98 = arith.negf %97 : vector<8x128xf32>
    %99 = math.exp %98 : vector<8x128xf32>
    %cst_34 = arith.constant 1.000000e+00 : f32
    %100 = vector.broadcast %cst_34 : f32 to vector<8x128xf32>
    %101 = arith.addf %100, %99 : vector<8x128xf32>
    %102 = arith.divf %100, %101 : vector<8x128xf32>
    %103 = vector.extract_strided_slice %96 {offsets = [0, 128], sizes = [8, 128], strides = [1, 1]} : vector<8x512xf32> to vector<8x128xf32>
    %104 = arith.negf %103 : vector<8x128xf32>
    %105 = math.exp %104 : vector<8x128xf32>
    %cst_35 = arith.constant 1.000000e+00 : f32
    %106 = vector.broadcast %cst_35 : f32 to vector<8x128xf32>
    %107 = arith.addf %106, %105 : vector<8x128xf32>
    %108 = arith.divf %106, %107 : vector<8x128xf32>
    %109 = vector.extract_strided_slice %96 {offsets = [0, 256], sizes = [8, 128], strides = [1, 1]} : vector<8x512xf32> to vector<8x128xf32>
    %110 = math.tanh %109 : vector<8x128xf32>
    %111 = vector.extract_strided_slice %96 {offsets = [0, 384], sizes = [8, 128], strides = [1, 1]} : vector<8x512xf32> to vector<8x128xf32>
    %112 = arith.negf %111 : vector<8x128xf32>
    %113 = math.exp %112 : vector<8x128xf32>
    %cst_36 = arith.constant 1.000000e+00 : f32
    %114 = vector.broadcast %cst_36 : f32 to vector<8x128xf32>
    %115 = arith.addf %114, %113 : vector<8x128xf32>
    %116 = arith.divf %114, %115 : vector<8x128xf32>
    %117 = arith.mulf %108, %83 : vector<8x128xf32>
    %118 = arith.mulf %102, %110 : vector<8x128xf32>
    %119 = arith.addf %117, %118 : vector<8x128xf32>
    %120 = math.tanh %119 : vector<8x128xf32>
    %121 = arith.mulf %116, %120 : vector<8x128xf32>
    %122 = arith.truncf %121 : vector<8x128xf32> to vector<8x128xbf16>
    %cst_37 = arith.constant dense<0.000000e+00> : vector<8x128xf32>
    %123 = tpu.matmul %122, %17, %cst_37 {dimension_numbers = #tpu.dot_dimension_numbers<[1], [0], [0], [1], [0, 0, 1, 1], [], []>} : vector<8x128xbf16>, vector<128x128xbf16>, vector<8x128xf32> -> vector<8x128xf32>
    %124 = vector.broadcast %18 : vector<1x128xf32> to vector<8x128xf32>
    %125 = arith.addf %123, %124 : vector<8x128xf32>
    %c2 = arith.constant 2 : index
    %c0_38 = arith.constant 0 : index
    %c0_39 = arith.constant 0 : index
    %126 = vector.load %arg7[%c2, %c0_38, %c0_39] : memref<8x8x128xf32, #tpu.memory_space<vmem>>, vector<1x8x128xf32>
    %127 = vector.shape_cast %126 : vector<1x8x128xf32> to vector<8x128xf32>
    %128 = vector.shape_cast %125 : vector<8x128xf32> to vector<1x8x128xf32>
    tpu.vector_store %arg7[%c2, %c0_38, %c0_39], %128 {strides = array<i32>} : memref<8x8x128xf32, #tpu.memory_space<vmem>>, vector<1x8x128xf32>,
    %129 = vector.extract_strided_slice %15 {offsets = [24, 0], sizes = [8, 512], strides = [1, 1]} : vector<64x512xf32> to vector<8x512xf32>
    %130 = arith.truncf %121 : vector<8x128xf32> to vector<8x128xbf16>
    %cst_40 = arith.constant dense<0.000000e+00> : vector<8x512xf32>
    %131 = tpu.matmul %130, %16, %cst_40 {dimension_numbers = #tpu.dot_dimension_numbers<[1], [0], [0], [1], [0, 0, 1, 1], [], []>} : vector<8x128xbf16>, vector<128x512xbf16>, vector<8x512xf32> -> vector<8x512xf32>
    %132 = arith.addf %129, %131 : vector<8x512xf32>
    %133 = vector.extract_strided_slice %132 {offsets = [0, 0], sizes = [8, 128], strides = [1, 1]} : vector<8x512xf32> to vector<8x128xf32>
    %134 = arith.negf %133 : vector<8x128xf32>
    %135 = math.exp %134 : vector<8x128xf32>
    %cst_41 = arith.constant 1.000000e+00 : f32
    %136 = vector.broadcast %cst_41 : f32 to vector<8x128xf32>
    %137 = arith.addf %136, %135 : vector<8x128xf32>
    %138 = arith.divf %136, %137 : vector<8x128xf32>
    %139 = vector.extract_strided_slice %132 {offsets = [0, 128], sizes = [8, 128], strides = [1, 1]} : vector<8x512xf32> to vector<8x128xf32>
    %140 = arith.negf %139 : vector<8x128xf32>
    %141 = math.exp %140 : vector<8x128xf32>
    %cst_42 = arith.constant 1.000000e+00 : f32
    %142 = vector.broadcast %cst_42 : f32 to vector<8x128xf32>
    %143 = arith.addf %142, %141 : vector<8x128xf32>
    %144 = arith.divf %142, %143 : vector<8x128xf32>
    %145 = vector.extract_strided_slice %132 {offsets = [0, 256], sizes = [8, 128], strides = [1, 1]} : vector<8x512xf32> to vector<8x128xf32>
    %146 = math.tanh %145 : vector<8x128xf32>
    %147 = vector.extract_strided_slice %132 {offsets = [0, 384], sizes = [8, 128], strides = [1, 1]} : vector<8x512xf32> to vector<8x128xf32>
    %148 = arith.negf %147 : vector<8x128xf32>
    %149 = math.exp %148 : vector<8x128xf32>
    %cst_43 = arith.constant 1.000000e+00 : f32
    %150 = vector.broadcast %cst_43 : f32 to vector<8x128xf32>
    %151 = arith.addf %150, %149 : vector<8x128xf32>
    %152 = arith.divf %150, %151 : vector<8x128xf32>
    %153 = arith.mulf %144, %119 : vector<8x128xf32>
    %154 = arith.mulf %138, %146 : vector<8x128xf32>
    %155 = arith.addf %153, %154 : vector<8x128xf32>
    %156 = math.tanh %155 : vector<8x128xf32>
    %157 = arith.mulf %152, %156 : vector<8x128xf32>
    %158 = arith.truncf %157 : vector<8x128xf32> to vector<8x128xbf16>
    %cst_44 = arith.constant dense<0.000000e+00> : vector<8x128xf32>
    %159 = tpu.matmul %158, %17, %cst_44 {dimension_numbers = #tpu.dot_dimension_numbers<[1], [0], [0], [1], [0, 0, 1, 1], [], []>} : vector<8x128xbf16>, vector<128x128xbf16>, vector<8x128xf32> -> vector<8x128xf32>
    %160 = vector.broadcast %18 : vector<1x128xf32> to vector<8x128xf32>
    %161 = arith.addf %159, %160 : vector<8x128xf32>
    %c3 = arith.constant 3 : index
    %c0_45 = arith.constant 0 : index
    %c0_46 = arith.constant 0 : index
    %162 = vector.load %arg7[%c3, %c0_45, %c0_46] : memref<8x8x128xf32, #tpu.memory_space<vmem>>, vector<1x8x128xf32>
    %163 = vector.shape_cast %162 : vector<1x8x128xf32> to vector<8x128xf32>
    %164 = vector.shape_cast %161 : vector<8x128xf32> to vector<1x8x128xf32>
    tpu.vector_store %arg7[%c3, %c0_45, %c0_46], %164 {strides = array<i32>} : memref<8x8x128xf32, #tpu.memory_space<vmem>>, vector<1x8x128xf32>,
    %165 = vector.extract_strided_slice %15 {offsets = [32, 0], sizes = [8, 512], strides = [1, 1]} : vector<64x512xf32> to vector<8x512xf32>
    %166 = arith.truncf %157 : vector<8x128xf32> to vector<8x128xbf16>
    %cst_47 = arith.constant dense<0.000000e+00> : vector<8x512xf32>
    %167 = tpu.matmul %166, %16, %cst_47 {dimension_numbers = #tpu.dot_dimension_numbers<[1], [0], [0], [1], [0, 0, 1, 1], [], []>} : vector<8x128xbf16>, vector<128x512xbf16>, vector<8x512xf32> -> vector<8x512xf32>
    %168 = arith.addf %165, %167 : vector<8x512xf32>
    %169 = vector.extract_strided_slice %168 {offsets = [0, 0], sizes = [8, 128], strides = [1, 1]} : vector<8x512xf32> to vector<8x128xf32>
    %170 = arith.negf %169 : vector<8x128xf32>
    %171 = math.exp %170 : vector<8x128xf32>
    %cst_48 = arith.constant 1.000000e+00 : f32
    %172 = vector.broadcast %cst_48 : f32 to vector<8x128xf32>
    %173 = arith.addf %172, %171 : vector<8x128xf32>
    %174 = arith.divf %172, %173 : vector<8x128xf32>
    %175 = vector.extract_strided_slice %168 {offsets = [0, 128], sizes = [8, 128], strides = [1, 1]} : vector<8x512xf32> to vector<8x128xf32>
    %176 = arith.negf %175 : vector<8x128xf32>
    %177 = math.exp %176 : vector<8x128xf32>
    %cst_49 = arith.constant 1.000000e+00 : f32
    %178 = vector.broadcast %cst_49 : f32 to vector<8x128xf32>
    %179 = arith.addf %178, %177 : vector<8x128xf32>
    %180 = arith.divf %178, %179 : vector<8x128xf32>
    %181 = vector.extract_strided_slice %168 {offsets = [0, 256], sizes = [8, 128], strides = [1, 1]} : vector<8x512xf32> to vector<8x128xf32>
    %182 = math.tanh %181 : vector<8x128xf32>
    %183 = vector.extract_strided_slice %168 {offsets = [0, 384], sizes = [8, 128], strides = [1, 1]} : vector<8x512xf32> to vector<8x128xf32>
    %184 = arith.negf %183 : vector<8x128xf32>
    %185 = math.exp %184 : vector<8x128xf32>
    %cst_50 = arith.constant 1.000000e+00 : f32
    %186 = vector.broadcast %cst_50 : f32 to vector<8x128xf32>
    %187 = arith.addf %186, %185 : vector<8x128xf32>
    %188 = arith.divf %186, %187 : vector<8x128xf32>
    %189 = arith.mulf %180, %155 : vector<8x128xf32>
    %190 = arith.mulf %174, %182 : vector<8x128xf32>
    %191 = arith.addf %189, %190 : vector<8x128xf32>
    %192 = math.tanh %191 : vector<8x128xf32>
    %193 = arith.mulf %188, %192 : vector<8x128xf32>
    %194 = arith.truncf %193 : vector<8x128xf32> to vector<8x128xbf16>
    %cst_51 = arith.constant dense<0.000000e+00> : vector<8x128xf32>
    %195 = tpu.matmul %194, %17, %cst_51 {dimension_numbers = #tpu.dot_dimension_numbers<[1], [0], [0], [1], [0, 0, 1, 1], [], []>} : vector<8x128xbf16>, vector<128x128xbf16>, vector<8x128xf32> -> vector<8x128xf32>
    %196 = vector.broadcast %18 : vector<1x128xf32> to vector<8x128xf32>
    %197 = arith.addf %195, %196 : vector<8x128xf32>
    %c4 = arith.constant 4 : index
    %c0_52 = arith.constant 0 : index
    %c0_53 = arith.constant 0 : index
    %198 = vector.load %arg7[%c4, %c0_52, %c0_53] : memref<8x8x128xf32, #tpu.memory_space<vmem>>, vector<1x8x128xf32>
    %199 = vector.shape_cast %198 : vector<1x8x128xf32> to vector<8x128xf32>
    %200 = vector.shape_cast %197 : vector<8x128xf32> to vector<1x8x128xf32>
    tpu.vector_store %arg7[%c4, %c0_52, %c0_53], %200 {strides = array<i32>} : memref<8x8x128xf32, #tpu.memory_space<vmem>>, vector<1x8x128xf32>,
    %201 = vector.extract_strided_slice %15 {offsets = [40, 0], sizes = [8, 512], strides = [1, 1]} : vector<64x512xf32> to vector<8x512xf32>
    %202 = arith.truncf %193 : vector<8x128xf32> to vector<8x128xbf16>
    %cst_54 = arith.constant dense<0.000000e+00> : vector<8x512xf32>
    %203 = tpu.matmul %202, %16, %cst_54 {dimension_numbers = #tpu.dot_dimension_numbers<[1], [0], [0], [1], [0, 0, 1, 1], [], []>} : vector<8x128xbf16>, vector<128x512xbf16>, vector<8x512xf32> -> vector<8x512xf32>
    %204 = arith.addf %201, %203 : vector<8x512xf32>
    %205 = vector.extract_strided_slice %204 {offsets = [0, 0], sizes = [8, 128], strides = [1, 1]} : vector<8x512xf32> to vector<8x128xf32>
    %206 = arith.negf %205 : vector<8x128xf32>
    %207 = math.exp %206 : vector<8x128xf32>
    %cst_55 = arith.constant 1.000000e+00 : f32
    %208 = vector.broadcast %cst_55 : f32 to vector<8x128xf32>
    %209 = arith.addf %208, %207 : vector<8x128xf32>
    %210 = arith.divf %208, %209 : vector<8x128xf32>
    %211 = vector.extract_strided_slice %204 {offsets = [0, 128], sizes = [8, 128], strides = [1, 1]} : vector<8x512xf32> to vector<8x128xf32>
    %212 = arith.negf %211 : vector<8x128xf32>
    %213 = math.exp %212 : vector<8x128xf32>
    %cst_56 = arith.constant 1.000000e+00 : f32
    %214 = vector.broadcast %cst_56 : f32 to vector<8x128xf32>
    %215 = arith.addf %214, %213 : vector<8x128xf32>
    %216 = arith.divf %214, %215 : vector<8x128xf32>
    %217 = vector.extract_strided_slice %204 {offsets = [0, 256], sizes = [8, 128], strides = [1, 1]} : vector<8x512xf32> to vector<8x128xf32>
    %218 = math.tanh %217 : vector<8x128xf32>
    %219 = vector.extract_strided_slice %204 {offsets = [0, 384], sizes = [8, 128], strides = [1, 1]} : vector<8x512xf32> to vector<8x128xf32>
    %220 = arith.negf %219 : vector<8x128xf32>
    %221 = math.exp %220 : vector<8x128xf32>
    %cst_57 = arith.constant 1.000000e+00 : f32
    %222 = vector.broadcast %cst_57 : f32 to vector<8x128xf32>
    %223 = arith.addf %222, %221 : vector<8x128xf32>
    %224 = arith.divf %222, %223 : vector<8x128xf32>
    %225 = arith.mulf %216, %191 : vector<8x128xf32>
    %226 = arith.mulf %210, %218 : vector<8x128xf32>
    %227 = arith.addf %225, %226 : vector<8x128xf32>
    %228 = math.tanh %227 : vector<8x128xf32>
    %229 = arith.mulf %224, %228 : vector<8x128xf32>
    %230 = arith.truncf %229 : vector<8x128xf32> to vector<8x128xbf16>
    %cst_58 = arith.constant dense<0.000000e+00> : vector<8x128xf32>
    %231 = tpu.matmul %230, %17, %cst_58 {dimension_numbers = #tpu.dot_dimension_numbers<[1], [0], [0], [1], [0, 0, 1, 1], [], []>} : vector<8x128xbf16>, vector<128x128xbf16>, vector<8x128xf32> -> vector<8x128xf32>
    %232 = vector.broadcast %18 : vector<1x128xf32> to vector<8x128xf32>
    %233 = arith.addf %231, %232 : vector<8x128xf32>
    %c5 = arith.constant 5 : index
    %c0_59 = arith.constant 0 : index
    %c0_60 = arith.constant 0 : index
    %234 = vector.load %arg7[%c5, %c0_59, %c0_60] : memref<8x8x128xf32, #tpu.memory_space<vmem>>, vector<1x8x128xf32>
    %235 = vector.shape_cast %234 : vector<1x8x128xf32> to vector<8x128xf32>
    %236 = vector.shape_cast %233 : vector<8x128xf32> to vector<1x8x128xf32>
    tpu.vector_store %arg7[%c5, %c0_59, %c0_60], %236 {strides = array<i32>} : memref<8x8x128xf32, #tpu.memory_space<vmem>>, vector<1x8x128xf32>,
    %237 = vector.extract_strided_slice %15 {offsets = [48, 0], sizes = [8, 512], strides = [1, 1]} : vector<64x512xf32> to vector<8x512xf32>
    %238 = arith.truncf %229 : vector<8x128xf32> to vector<8x128xbf16>
    %cst_61 = arith.constant dense<0.000000e+00> : vector<8x512xf32>
    %239 = tpu.matmul %238, %16, %cst_61 {dimension_numbers = #tpu.dot_dimension_numbers<[1], [0], [0], [1], [0, 0, 1, 1], [], []>} : vector<8x128xbf16>, vector<128x512xbf16>, vector<8x512xf32> -> vector<8x512xf32>
    %240 = arith.addf %237, %239 : vector<8x512xf32>
    %241 = vector.extract_strided_slice %240 {offsets = [0, 0], sizes = [8, 128], strides = [1, 1]} : vector<8x512xf32> to vector<8x128xf32>
    %242 = arith.negf %241 : vector<8x128xf32>
    %243 = math.exp %242 : vector<8x128xf32>
    %cst_62 = arith.constant 1.000000e+00 : f32
    %244 = vector.broadcast %cst_62 : f32 to vector<8x128xf32>
    %245 = arith.addf %244, %243 : vector<8x128xf32>
    %246 = arith.divf %244, %245 : vector<8x128xf32>
    %247 = vector.extract_strided_slice %240 {offsets = [0, 128], sizes = [8, 128], strides = [1, 1]} : vector<8x512xf32> to vector<8x128xf32>
    %248 = arith.negf %247 : vector<8x128xf32>
    %249 = math.exp %248 : vector<8x128xf32>
    %cst_63 = arith.constant 1.000000e+00 : f32
    %250 = vector.broadcast %cst_63 : f32 to vector<8x128xf32>
    %251 = arith.addf %250, %249 : vector<8x128xf32>
    %252 = arith.divf %250, %251 : vector<8x128xf32>
    %253 = vector.extract_strided_slice %240 {offsets = [0, 256], sizes = [8, 128], strides = [1, 1]} : vector<8x512xf32> to vector<8x128xf32>
    %254 = math.tanh %253 : vector<8x128xf32>
    %255 = vector.extract_strided_slice %240 {offsets = [0, 384], sizes = [8, 128], strides = [1, 1]} : vector<8x512xf32> to vector<8x128xf32>
    %256 = arith.negf %255 : vector<8x128xf32>
    %257 = math.exp %256 : vector<8x128xf32>
    %cst_64 = arith.constant 1.000000e+00 : f32
    %258 = vector.broadcast %cst_64 : f32 to vector<8x128xf32>
    %259 = arith.addf %258, %257 : vector<8x128xf32>
    %260 = arith.divf %258, %259 : vector<8x128xf32>
    %261 = arith.mulf %252, %227 : vector<8x128xf32>
    %262 = arith.mulf %246, %254 : vector<8x128xf32>
    %263 = arith.addf %261, %262 : vector<8x128xf32>
    %264 = math.tanh %263 : vector<8x128xf32>
    %265 = arith.mulf %260, %264 : vector<8x128xf32>
    %266 = arith.truncf %265 : vector<8x128xf32> to vector<8x128xbf16>
    %cst_65 = arith.constant dense<0.000000e+00> : vector<8x128xf32>
    %267 = tpu.matmul %266, %17, %cst_65 {dimension_numbers = #tpu.dot_dimension_numbers<[1], [0], [0], [1], [0, 0, 1, 1], [], []>} : vector<8x128xbf16>, vector<128x128xbf16>, vector<8x128xf32> -> vector<8x128xf32>
    %268 = vector.broadcast %18 : vector<1x128xf32> to vector<8x128xf32>
    %269 = arith.addf %267, %268 : vector<8x128xf32>
    %c6 = arith.constant 6 : index
    %c0_66 = arith.constant 0 : index
    %c0_67 = arith.constant 0 : index
    %270 = vector.load %arg7[%c6, %c0_66, %c0_67] : memref<8x8x128xf32, #tpu.memory_space<vmem>>, vector<1x8x128xf32>
    %271 = vector.shape_cast %270 : vector<1x8x128xf32> to vector<8x128xf32>
    %272 = vector.shape_cast %269 : vector<8x128xf32> to vector<1x8x128xf32>
    tpu.vector_store %arg7[%c6, %c0_66, %c0_67], %272 {strides = array<i32>} : memref<8x8x128xf32, #tpu.memory_space<vmem>>, vector<1x8x128xf32>,
    %273 = vector.extract_strided_slice %15 {offsets = [56, 0], sizes = [8, 512], strides = [1, 1]} : vector<64x512xf32> to vector<8x512xf32>
    %274 = arith.truncf %265 : vector<8x128xf32> to vector<8x128xbf16>
    %cst_68 = arith.constant dense<0.000000e+00> : vector<8x512xf32>
    %275 = tpu.matmul %274, %16, %cst_68 {dimension_numbers = #tpu.dot_dimension_numbers<[1], [0], [0], [1], [0, 0, 1, 1], [], []>} : vector<8x128xbf16>, vector<128x512xbf16>, vector<8x512xf32> -> vector<8x512xf32>
    %276 = arith.addf %273, %275 : vector<8x512xf32>
    %277 = vector.extract_strided_slice %276 {offsets = [0, 0], sizes = [8, 128], strides = [1, 1]} : vector<8x512xf32> to vector<8x128xf32>
    %278 = arith.negf %277 : vector<8x128xf32>
    %279 = math.exp %278 : vector<8x128xf32>
    %cst_69 = arith.constant 1.000000e+00 : f32
    %280 = vector.broadcast %cst_69 : f32 to vector<8x128xf32>
    %281 = arith.addf %280, %279 : vector<8x128xf32>
    %282 = arith.divf %280, %281 : vector<8x128xf32>
    %283 = vector.extract_strided_slice %276 {offsets = [0, 128], sizes = [8, 128], strides = [1, 1]} : vector<8x512xf32> to vector<8x128xf32>
    %284 = arith.negf %283 : vector<8x128xf32>
    %285 = math.exp %284 : vector<8x128xf32>
    %cst_70 = arith.constant 1.000000e+00 : f32
    %286 = vector.broadcast %cst_70 : f32 to vector<8x128xf32>
    %287 = arith.addf %286, %285 : vector<8x128xf32>
    %288 = arith.divf %286, %287 : vector<8x128xf32>
    %289 = vector.extract_strided_slice %276 {offsets = [0, 256], sizes = [8, 128], strides = [1, 1]} : vector<8x512xf32> to vector<8x128xf32>
    %290 = math.tanh %289 : vector<8x128xf32>
    %291 = vector.extract_strided_slice %276 {offsets = [0, 384], sizes = [8, 128], strides = [1, 1]} : vector<8x512xf32> to vector<8x128xf32>
    %292 = arith.negf %291 : vector<8x128xf32>
    %293 = math.exp %292 : vector<8x128xf32>
    %cst_71 = arith.constant 1.000000e+00 : f32
    %294 = vector.broadcast %cst_71 : f32 to vector<8x128xf32>
    %295 = arith.addf %294, %293 : vector<8x128xf32>
    %296 = arith.divf %294, %295 : vector<8x128xf32>
    %297 = arith.mulf %288, %263 : vector<8x128xf32>
    %298 = arith.mulf %282, %290 : vector<8x128xf32>
    %299 = arith.addf %297, %298 : vector<8x128xf32>
    %300 = math.tanh %299 : vector<8x128xf32>
    %301 = arith.mulf %296, %300 : vector<8x128xf32>
    %302 = arith.truncf %301 : vector<8x128xf32> to vector<8x128xbf16>
    %cst_72 = arith.constant dense<0.000000e+00> : vector<8x128xf32>
    %303 = tpu.matmul %302, %17, %cst_72 {dimension_numbers = #tpu.dot_dimension_numbers<[1], [0], [0], [1], [0, 0, 1, 1], [], []>} : vector<8x128xbf16>, vector<128x128xbf16>, vector<8x128xf32> -> vector<8x128xf32>
    %304 = vector.broadcast %18 : vector<1x128xf32> to vector<8x128xf32>
    %305 = arith.addf %303, %304 : vector<8x128xf32>
    %c7 = arith.constant 7 : index
    %c0_73 = arith.constant 0 : index
    %c0_74 = arith.constant 0 : index
    %306 = vector.load %arg7[%c7, %c0_73, %c0_74] : memref<8x8x128xf32, #tpu.memory_space<vmem>>, vector<1x8x128xf32>
    %307 = vector.shape_cast %306 : vector<1x8x128xf32> to vector<8x128xf32>
    %308 = vector.shape_cast %305 : vector<8x128xf32> to vector<1x8x128xf32>
    tpu.vector_store %arg7[%c7, %c0_73, %c0_74], %308 {strides = array<i32>} : memref<8x8x128xf32, #tpu.memory_space<vmem>>, vector<1x8x128xf32>,
    return
  }
}

</mosaic_0001>

<llo_original>
// kernel: tpu_custom_call.1
$region0: #{tpu_custom_call.1}
  #allocation0 [shape = 'u32[]', space=smem, size = 0x4, offset = 0x4, fixed_abs, tag = 'smem constant byte address 0x4 - core index']
  #allocation1 [shape = 'u32[144,128]{1,0:T(1,128)}', space=vmem, size = 0x12000, scoped, tag = 'internal scratch']
  %s0 = inlined_call_operand.vmem [shape: s32[64,1], index: 0, kind: input, shape index: {}]
  %s1 = inlined_call_operand.vmem [shape: bf16[128,32], index: 1, kind: input, shape index: {}]
  %s2 = inlined_call_operand.vmem [shape: bf16[32,512], index: 2, kind: input, shape index: {}]
  %s3 = inlined_call_operand.vmem [shape: f32[1,512], index: 3, kind: input, shape index: {}]
  %s4 = inlined_call_operand.hbm [shape: bf16[128,512], index: 4, kind: input, shape index: {}]
  %s5 = inlined_call_operand.vmem [shape: bf16[128,128], index: 5, kind: input, shape index: {}]
  %s6 = inlined_call_operand.vmem [shape: f32[1,128], index: 6, kind: input, shape index: {}]
  %s7 = inlined_call_operand.hbm [shape: f32[8,8,128], index: 7, kind: output, shape index: {}]
  %s8 = sld [smem:[#allocation0]]
  $region42: #{tpu_custom_call.1} parent=0
    _
  %s10 = ssub.s32 1, %s8
  %s11 = scalar_select 0, %s10, %s8
  $region1: #{tpu_custom_call.1} parent=0
    #allocation2 [shape = 'u8[131072]{0}', space=vmem, size = 0x20000, scoped, tag = 'input window, operand 4, single buffered']
    #allocation3 [shape = 's32[1]{0}', space=sflag, size = 0x4, scoped, tag = 'scoped memory for tpu_custom_call.1']
    #allocation4 [shape = 's32[1]{0}', space=sflag, size = 0x4, scoped, tag = 'scoped memory for tpu_custom_call.1']
    #allocation5 [shape = 'u8[32768]{0}', space=vmem, size = 0x8000, scoped, tag = 'output window, operand 0, single buffered']
    %12 = vsyncpa [#allocation3], 0
    %13 = vsyncpa [#allocation4], 0
    // Predicated region
    $region2: #{tpu_custom_call.1} parent=1 // pred_check
      _
    $region3: #{tpu_custom_call.1} parent=1 // pred_check_branch
      %15 = sbr.rel (0) target = $region5
    $region4: #{tpu_custom_call.1} parent=1 // pred_region
      _
    $region5: #{tpu_custom_call.1} parent=1 // pred_fallthru
      _
    // Predicated region
    $region6: #{tpu_custom_call.1} parent=1 // pred_check
      _
    $region7: #{tpu_custom_call.1} parent=1 // pred_check_branch
      %17 = sbr.rel (0) target = $region9
    $region8: #{tpu_custom_call.1} parent=1 // pred_region
      _
    $region9: #{tpu_custom_call.1} parent=1 // pred_fallthru
      _
    // Predicated region
    $region10: #{tpu_custom_call.1} parent=1 // pred_check
      _
    $region11: #{tpu_custom_call.1} parent=1 // pred_check_branch
      %19 = sbr.rel (0) target = $region13
    $region12: #{tpu_custom_call.1} parent=1 // pred_region
      _
    $region13: #{tpu_custom_call.1} parent=1 // pred_fallthru
      _
    // Predicated region
    $region14: #{tpu_custom_call.1} parent=1 // pred_check
      _
    $region15: #{tpu_custom_call.1} parent=1 // pred_check_branch
      %21 = sbr.rel (0) target = $region17
    $region16: #{tpu_custom_call.1} parent=1 // pred_region
      _
    $region17: #{tpu_custom_call.1} parent=1 // pred_fallthru
      _
    // Predicated region
    $region18: #{tpu_custom_call.1} parent=1 // pred_check
      _
    $region19: #{tpu_custom_call.1} parent=1 // pred_check_branch
      %23 = sbr.rel (0) target = $region21
    $region20: #{tpu_custom_call.1} parent=1 // pred_region
      %s25 = ssub.s32 4096, 4096
      %26 = vsyncadd [#allocation3], %s25
      %s27 = sshll.u32 [#allocation2], 4
      %s28 = int_to_ptr.vmem [resolvable:$true] %s27
      %33 = dma.hbm_to_vmem [thread:$0]  %s4, 4096, %s28, [#allocation3], 256, 256, 16
    $region21: #{tpu_custom_call.1} parent=1 // pred_fallthru
      _
    // Predicated region
    $region22: #{tpu_custom_call.1} parent=1 // pred_check
      _
    $region23: #{tpu_custom_call.1} parent=1 // pred_check_branch
      %35 = sbr.rel (0) target = $region25
    $region24: #{tpu_custom_call.1} parent=1 // pred_region
      _
    $region25: #{tpu_custom_call.1} parent=1 // pred_fallthru
      _
    // Predicated region
    $region26: #{tpu_custom_call.1} parent=1 // pred_check
      _
    $region27: #{tpu_custom_call.1} parent=1 // pred_check_branch
      %37 = sbr.rel (0) target = $region29
    $region28: #{tpu_custom_call.1} parent=1 // pred_region
      _
    $region29: #{tpu_custom_call.1} parent=1 // pred_fallthru
      _
    // Predicated region
    $region30: #{tpu_custom_call.1} parent=1 // pred_check
      _
    $region31: #{tpu_custom_call.1} parent=1 // pred_check_branch
      %39 = sbr.rel (0) target = $region33
    $region32: #{tpu_custom_call.1} parent=1 // pred_region
      %40 = dma.done [#allocation3], 4096
    $region33: #{tpu_custom_call.1} parent=1 // pred_fallthru
      _
    %v42 = vld [vmem:[%s0] sm:$0xff]
    %v43 = vld [vmem:[%s0 + $0x8] sm:$0xff]
    %v44 = vld [vmem:[%s0 + $0x10] sm:$0xff]
    %v45 = vld [vmem:[%s0 + $0x18] sm:$0xff]
    %v46 = vld [vmem:[%s0 + $0x20] sm:$0xff]
    %v47 = vld [vmem:[%s0 + $0x28] sm:$0xff]
    %v48 = vld [vmem:[%s0 + $0x30] sm:$0xff]
    %v49 = vld [vmem:[%s0 + $0x38] sm:$0xff]
    %v50 = vlaneseq
    %v51 = vand.u32 %v50, 127
    %52 = vset.pattern.permute.xlu0 0
    %53 = vperm.xlu0 %52, %v42
    %v54 = vpop.permute.xlu0 %53
    %55 = vset.pattern.permute.xlu0 0
    %56 = vperm.xlu0 %55, %v43
    %v57 = vpop.permute.xlu0 %56
    %58 = vset.pattern.permute.xlu0 0
    %59 = vperm.xlu0 %58, %v44
    %v60 = vpop.permute.xlu0 %59
    %61 = vset.pattern.permute.xlu0 0
    %62 = vperm.xlu0 %61, %v45
    %v63 = vpop.permute.xlu0 %62
    %64 = vset.pattern.permute.xlu0 0
    %65 = vperm.xlu0 %64, %v46
    %v66 = vpop.permute.xlu0 %65
    %67 = vset.pattern.permute.xlu0 0
    %68 = vperm.xlu0 %67, %v47
    %v69 = vpop.permute.xlu0 %68
    %70 = vset.pattern.permute.xlu0 0
    %71 = vperm.xlu0 %70, %v48
    %v72 = vpop.permute.xlu0 %71
    %73 = vset.pattern.permute.xlu0 0
    %74 = vperm.xlu0 %73, %v49
    %v75 = vpop.permute.xlu0 %74
    %vm76 = vcmp.eq.s32.totalorder %v54, %v51
    %vm77 = vcmp.eq.s32.totalorder %v57, %v51
    %vm78 = vcmp.eq.s32.totalorder %v60, %v51
    %vm79 = vcmp.eq.s32.totalorder %v63, %v51
    %vm80 = vcmp.eq.s32.totalorder %v66, %v51
    %vm81 = vcmp.eq.s32.totalorder %v69, %v51
    %vm82 = vcmp.eq.s32.totalorder %v72, %v51
    %vm83 = vcmp.eq.s32.totalorder %v75, %v51
    %v84 = vsel %vm76, 1.0, 0.0
    %v85 = vsel %vm77, 1.0, 0.0
    %v86 = vsel %vm78, 1.0, 0.0
    %v87 = vsel %vm79, 1.0, 0.0
    %v88 = vsel %vm80, 1.0, 0.0
    %v89 = vsel %vm81, 1.0, 0.0
    %v90 = vsel %vm82, 1.0, 0.0
    %v91 = vsel %vm83, 1.0, 0.0
    %v92 = vpack.c.bf16 %v85, %v84
    %v93 = vpack.c.bf16 %v87, %v86
    %v94 = vpack.c.bf16 %v89, %v88
    %v95 = vpack.c.bf16 %v91, %v90
    %v96 = vld [vmem:[%s1] sm:$0xf]
    %v97 = vld [vmem:[%s1 + $0x4] sm:$0xf]
    %v98 = vld [vmem:[%s1 + $0x8] sm:$0xf]
    %v99 = vld [vmem:[%s1 + $0xc] sm:$0xf]
    %v100 = vld [vmem:[%s1 + $0x10] sm:$0xf]
    %v101 = vld [vmem:[%s1 + $0x14] sm:$0xf]
    %v102 = vld [vmem:[%s1 + $0x18] sm:$0xf]
    %v103 = vld [vmem:[%s1 + $0x1c] sm:$0xf]
    %v104 = vld [vmem:[%s1 + $0x20] sm:$0xf]
    %v105 = vld [vmem:[%s1 + $0x24] sm:$0xf]
    %v106 = vld [vmem:[%s1 + $0x28] sm:$0xf]
    %v107 = vld [vmem:[%s1 + $0x2c] sm:$0xf]
    %v108 = vld [vmem:[%s1 + $0x30] sm:$0xf]
    %v109 = vld [vmem:[%s1 + $0x34] sm:$0xf]
    %v110 = vld [vmem:[%s1 + $0x38] sm:$0xf]
    %v111 = vld [vmem:[%s1 + $0x3c] sm:$0xf]
    %v128 = vunpack.c.l.b16 %v96
    %v129 = vunpack.c.l.b16 %v97
    %v130 = vunpack.c.l.b16 %v98
    %v131 = vunpack.c.l.b16 %v99
    %v132 = vunpack.c.l.b16 %v100
    %v133 = vunpack.c.l.b16 %v101
    %v134 = vunpack.c.l.b16 %v102
    %v135 = vunpack.c.l.b16 %v103
    %v136 = vunpack.c.l.b16 %v104
    %v137 = vunpack.c.l.b16 %v105
    %v138 = vunpack.c.l.b16 %v106
    %v139 = vunpack.c.l.b16 %v107
    %v140 = vunpack.c.l.b16 %v108
    %v141 = vunpack.c.l.b16 %v109
    %v142 = vunpack.c.l.b16 %v110
    %v143 = vunpack.c.l.b16 %v111
    %v144 = vpack.c.b16 %v129, %v128
    %v145 = vpack.c.b16 %v131, %v130
    %v146 = vpack.c.b16 %v133, %v132
    %v147 = vpack.c.b16 %v135, %v134
    %v148 = vpack.c.b16 %v137, %v136
    %v149 = vpack.c.b16 %v139, %v138
    %v150 = vpack.c.b16 %v141, %v140
    %v151 = vpack.c.b16 %v143, %v142
    %160 = vmatprep.subr.bf16.mxu0 0
    %161 = vmatpush1.bf16.msra.mxu0 %v151
    %162 = vmatprep.subr.bf16.mxu0 0
    %163 = vmatpush1.bf16.msra.mxu0 %v150
    %164 = vmatprep.subr.bf16.mxu0 0
    %165 = vmatpush1.bf16.msra.mxu0 %v149
    %166 = vmatprep.subr.bf16.mxu0 0
    %167 = vmatpush1.bf16.msra.mxu0 %v148
    %168 = vmatprep.subr.bf16.mxu0 0
    %169 = vmatpush1.bf16.msra.mxu0 %v147
    %170 = vmatprep.subr.bf16.mxu0 0
    %171 = vmatpush1.bf16.msra.mxu0 %v146
    %172 = vmatprep.subr.bf16.mxu0 0
    %173 = vmatpush1.bf16.msra.mxu0 %v145
    %174 = vmatprep.subr.bf16.mxu0 0
    %175 = vmatpush1.bf16.msra.mxu0 %v144
    %176 = vmatprep.subr.bf16.mxu0 0
    %177 = vmatpush2.bf16.msra.mxu0 0
    %178 = vmatprep.subr.bf16.mxu0 0
    %179 = vmatpush2.bf16.msra.mxu0 0
    %180 = vmatprep.subr.bf16.mxu0 0
    %181 = vmatpush2.bf16.msra.mxu0 0
    %182 = vmatprep.subr.bf16.mxu0 0
    %183 = vmatpush2.bf16.msra.mxu0 0
    %184 = vmatprep.subr.bf16.mxu0 0
    %185 = vmatpush2.bf16.msra.mxu0 0
    %186 = vmatprep.subr.bf16.mxu0 0
    %187 = vmatpush2.bf16.msra.mxu0 0
    %188 = vmatprep.subr.bf16.mxu0 0
    %189 = vmatpush2.bf16.msra.mxu0 0
    %190 = vmatprep.subr.bf16.mxu0 0
    %191 = vmatpush2.bf16.msra.mxu0 0
    %192 = vmatprep.mubr.bf16.mxu0 0
    %193 = vmatmul.mubr.bf16.gmra.mxu0 %v92
    %v194 = vpop.f32.mrf.mxu0
    %v195 = vadd.f32 0.0, %v194
    %v196 = vpop.f32.mrf.mxu0
    %v197 = vpop.f32.mrf.mxu0
    %v198 = vadd.f32 0.0, %v197
    %v199 = vpop.f32.mrf.mxu0
    %200 = vmatprep.mubr.bf16.mxu0 0
    %201 = vmatmul.mubr.bf16.gmra.mxu0 %v93
    %v202 = vpop.f32.mrf.mxu0
    %v203 = vadd.f32 0.0, %v202
    %v204 = vpop.f32.mrf.mxu0
    %v205 = vpop.f32.mrf.mxu0
    %v206 = vadd.f32 0.0, %v205
    %v207 = vpop.f32.mrf.mxu0
    %208 = vmatprep.mubr.bf16.mxu0 0
    %209 = vmatmul.mubr.bf16.gmra.mxu0 %v94
    %v210 = vpop.f32.mrf.mxu0
    %v211 = vadd.f32 0.0, %v210
    %v212 = vpop.f32.mrf.mxu0
    %v213 = vpop.f32.mrf.mxu0
    %v214 = vadd.f32 0.0, %v213
    %v215 = vpop.f32.mrf.mxu0
    %216 = vmatprep.mubr.bf16.mxu0 0
    %217 = vmatmul.mubr.bf16.gmra.mxu0 %v95
    %v218 = vpop.f32.mrf.mxu0
    %v219 = vadd.f32 0.0, %v218
    %v220 = vpop.f32.mrf.mxu0
    %v221 = vpop.f32.mrf.mxu0
    %v222 = vadd.f32 0.0, %v221
    %v223 = vpop.f32.mrf.mxu0
    %224 = vdwg.mxu0
    %v225 = vpack.c.bf16 %v198, %v195
    %v226 = vpack.c.bf16 %v206, %v203
    %v227 = vpack.c.bf16 %v214, %v211
    %v228 = vpack.c.bf16 %v222, %v219
    %v229 = vld [vmem:[%s2] sm:$0xff]
    %v230 = vld [vmem:[%s2 + $0x8] sm:$0xff]
    %v231 = vld [vmem:[%s2 + $0x10] sm:$0xff]
    %v232 = vld [vmem:[%s2 + $0x18] sm:$0xff]
    %v233 = vld [vmem:[%s2 + $0x20] sm:$0xff]
    %v234 = vld [vmem:[%s2 + $0x28] sm:$0xff]
    %v235 = vld [vmem:[%s2 + $0x30] sm:$0xff]
    %v236 = vld [vmem:[%s2 + $0x38] sm:$0xff]
    %v237 = vld [vmem:[%s3] sm:$0xf]
    %v239 = vlaneseq
    %v240 = vshrl.u32 %v239, 7
    %v241 = vsub.s32 0, %v240
    %v242 = vrot.slane %v237, %v241
    %v243 = vlaneseq
    %v244 = vshrl.u32 %v243, 7
    %v245 = vsub.s32 1, %v244
    %v246 = vrot.slane %v237, %v245
    %v247 = vlaneseq
    %v248 = vshrl.u32 %v247, 7
    %v249 = vsub.s32 2, %v248
    %v250 = vrot.slane %v237, %v249
    %v251 = vlaneseq
    %v252 = vshrl.u32 %v251, 7
    %v253 = vsub.s32 3, %v252
    %v254 = vrot.slane %v237, %v253
    %v267 = vunpack.c.l.b16 %v229
    %v268 = vunpack.c.h.b16 %v229
    %v269 = vunpack.c.l.b16 %v230
    %v270 = vunpack.c.h.b16 %v230
    %v271 = vunpack.c.l.b16 %v231
    %v272 = vunpack.c.h.b16 %v231
    %v273 = vunpack.c.l.b16 %v232
    %v274 = vunpack.c.h.b16 %v232
    %v275 = vunpack.c.l.b16 %v233
    %v276 = vunpack.c.h.b16 %v233
    %v277 = vunpack.c.l.b16 %v234
    %v278 = vunpack.c.h.b16 %v234
    %v279 = vunpack.c.l.b16 %v235
    %v280 = vunpack.c.h.b16 %v235
    %v281 = vunpack.c.l.b16 %v236
    %v282 = vunpack.c.h.b16 %v236
    %v283 = vpack.c.b16 %v271, %v267
    %v284 = vpack.c.b16 %v272, %v268
    %v285 = vpack.c.b16 %v273, %v269
    %v286 = vpack.c.b16 %v274, %v270
    %v287 = vpack.c.b16 %v279, %v275
    %v288 = vpack.c.b16 %v280, %v276
    %v289 = vpack.c.b16 %v281, %v277
    %v290 = vpack.c.b16 %v282, %v278
    %vm299 = vcmask 261120
    %v301 = vsel %vm299, %v225, 0
    %v304 = vsel %vm299, %v226, 0
    %v307 = vsel %vm299, %v227, 0
    %v310 = vsel %vm299, %v228, 0
    %312 = vmatprep.subr.bf16.mxu0 0
    %313 = vmatpush1.bf16.msra.mxu0 0
    %314 = vmatprep.subr.bf16.mxu0 0
    %315 = vmatpush1.bf16.msra.mxu0 0
    %316 = vmatprep.subr.bf16.mxu0 0
    %317 = vmatpush1.bf16.msra.mxu0 0
    %318 = vmatprep.subr.bf16.mxu0 0
    %319 = vmatpush1.bf16.msra.mxu0 0
    %320 = vmatprep.subr.bf16.mxu0 0
    %321 = vmatpush1.bf16.msra.mxu0 0
    %322 = vmatprep.subr.bf16.mxu0 0
    %323 = vmatpush1.bf16.msra.mxu0 0
    %324 = vmatprep.subr.bf16.mxu0 %v288
    %325 = vmatpush1.bf16.msra.mxu0 %v287
    %326 = vmatprep.subr.bf16.mxu0 %v284
    %327 = vmatpush1.bf16.msra.mxu0 %v283
    %328 = vmatprep.subr.bf16.mxu0 0
    %329 = vmatpush2.bf16.msra.mxu0 0
    %330 = vmatprep.subr.bf16.mxu0 0
    %331 = vmatpush2.bf16.msra.mxu0 0
    %332 = vmatprep.subr.bf16.mxu0 0
    %333 = vmatpush2.bf16.msra.mxu0 0
    %334 = vmatprep.subr.bf16.mxu0 0
    %335 = vmatpush2.bf16.msra.mxu0 0
    %336 = vmatprep.subr.bf16.mxu0 0
    %337 = vmatpush2.bf16.msra.mxu0 0
    %338 = vmatprep.subr.bf16.mxu0 0
    %339 = vmatpush2.bf16.msra.mxu0 0
    %340 = vmatprep.subr.bf16.mxu0 0
    %341 = vmatpush2.bf16.msra.mxu0 0
    %342 = vmatprep.subr.bf16.mxu0 0
    %343 = vmatpush2.bf16.msra.mxu0 0
    %344 = vmatprep.mubr.bf16.mxu0 0
    %345 = vmatmul.mubr.bf16.gmra.mxu0 %v301
    %v346 = vpop.f32.mrf.mxu0
    %v347 = vadd.f32 %v242, %v346
    %v348 = vpop.f32.mrf.mxu0
    %v349 = vadd.f32 %v246, %v348
    %v350 = vpop.f32.mrf.mxu0
    %v351 = vadd.f32 %v242, %v350
    %v352 = vpop.f32.mrf.mxu0
    %v353 = vadd.f32 %v246, %v352
    %354 = vmatprep.mubr.bf16.mxu0 0
    %355 = vmatmul.mubr.bf16.gmra.mxu0 %v304
    %v356 = vpop.f32.mrf.mxu0
    %v357 = vadd.f32 %v242, %v356
    %v358 = vpop.f32.mrf.mxu0
    %v359 = vadd.f32 %v246, %v358
    %v360 = vpop.f32.mrf.mxu0
    %v361 = vadd.f32 %v242, %v360
    %v362 = vpop.f32.mrf.mxu0
    %v363 = vadd.f32 %v246, %v362
    %364 = vmatprep.mubr.bf16.mxu0 0
    %365 = vmatmul.mubr.bf16.gmra.mxu0 %v307
    %v366 = vpop.f32.mrf.mxu0
    %v367 = vadd.f32 %v242, %v366
    %v368 = vpop.f32.mrf.mxu0
    %v369 = vadd.f32 %v246, %v368
    %v370 = vpop.f32.mrf.mxu0
    %v371 = vadd.f32 %v242, %v370
    %v372 = vpop.f32.mrf.mxu0
    %v373 = vadd.f32 %v246, %v372
    %374 = vmatprep.mubr.bf16.mxu0 0
    %375 = vmatmul.mubr.bf16.gmra.mxu0 %v310
    %v376 = vpop.f32.mrf.mxu0
    %v377 = vadd.f32 %v242, %v376
    %v378 = vpop.f32.mrf.mxu0
    %v379 = vadd.f32 %v246, %v378
    %v380 = vpop.f32.mrf.mxu0
    %v381 = vadd.f32 %v242, %v380
    %v382 = vpop.f32.mrf.mxu0
    %v383 = vadd.f32 %v246, %v382
    %384 = vdwg.mxu0
    %385 = vmatprep.subr.bf16.mxu0 0
    %386 = vmatpush1.bf16.msra.mxu0 0
    %387 = vmatprep.subr.bf16.mxu0 0
    %388 = vmatpush1.bf16.msra.mxu0 0
    %389 = vmatprep.subr.bf16.mxu0 0
    %390 = vmatpush1.bf16.msra.mxu0 0
    %391 = vmatprep.subr.bf16.mxu0 0
    %392 = vmatpush1.bf16.msra.mxu0 0
    %393 = vmatprep.subr.bf16.mxu0 0
    %394 = vmatpush1.bf16.msra.mxu0 0
    %395 = vmatprep.subr.bf16.mxu0 0
    %396 = vmatpush1.bf16.msra.mxu0 0
    %397 = vmatprep.subr.bf16.mxu0 %v290
    %398 = vmatpush1.bf16.msra.mxu0 %v289
    %399 = vmatprep.subr.bf16.mxu0 %v286
    %400 = vmatpush1.bf16.msra.mxu0 %v285
    %401 = vmatprep.subr.bf16.mxu0 0
    %402 = vmatpush2.bf16.msra.mxu0 0
    %403 = vmatprep.subr.bf16.mxu0 0
    %404 = vmatpush2.bf16.msra.mxu0 0
    %405 = vmatprep.subr.bf16.mxu0 0
    %406 = vmatpush2.bf16.msra.mxu0 0
    %407 = vmatprep.subr.bf16.mxu0 0
    %408 = vmatpush2.bf16.msra.mxu0 0
    %409 = vmatprep.subr.bf16.mxu0 0
    %410 = vmatpush2.bf16.msra.mxu0 0
    %411 = vmatprep.subr.bf16.mxu0 0
    %412 = vmatpush2.bf16.msra.mxu0 0
    %413 = vmatprep.subr.bf16.mxu0 0
    %414 = vmatpush2.bf16.msra.mxu0 0
    %415 = vmatprep.subr.bf16.mxu0 0
    %416 = vmatpush2.bf16.msra.mxu0 0
    %417 = vmatprep.mubr.bf16.mxu0 0
    %418 = vmatmul.mubr.bf16.gmra.mxu0 %v301
    %v419 = vpop.f32.mrf.mxu0
    %v420 = vadd.f32 %v250, %v419
    %v421 = vpop.f32.mrf.mxu0
    %v422 = vadd.f32 %v254, %v421
    %v423 = vpop.f32.mrf.mxu0
    %v424 = vadd.f32 %v250, %v423
    %v425 = vpop.f32.mrf.mxu0
    %v426 = vadd.f32 %v254, %v425
    %427 = vmatprep.mubr.bf16.mxu0 0
    %428 = vmatmul.mubr.bf16.gmra.mxu0 %v304
    %v429 = vpop.f32.mrf.mxu0
    %v430 = vadd.f32 %v250, %v429
    %v431 = vpop.f32.mrf.mxu0
    %v432 = vadd.f32 %v254, %v431
    %v433 = vpop.f32.mrf.mxu0
    %v434 = vadd.f32 %v250, %v433
    %v435 = vpop.f32.mrf.mxu0
    %v436 = vadd.f32 %v254, %v435
    %437 = vmatprep.mubr.bf16.mxu0 0
    %438 = vmatmul.mubr.bf16.gmra.mxu0 %v307
    %v439 = vpop.f32.mrf.mxu0
    %v440 = vadd.f32 %v250, %v439
    %v441 = vpop.f32.mrf.mxu0
    %v442 = vadd.f32 %v254, %v441
    %v443 = vpop.f32.mrf.mxu0
    %v444 = vadd.f32 %v250, %v443
    %v445 = vpop.f32.mrf.mxu0
    %v446 = vadd.f32 %v254, %v445
    %447 = vmatprep.mubr.bf16.mxu0 0
    %448 = vmatmul.mubr.bf16.gmra.mxu0 %v310
    %v449 = vpop.f32.mrf.mxu0
    %v450 = vadd.f32 %v250, %v449
    %v451 = vpop.f32.mrf.mxu0
    %v452 = vadd.f32 %v254, %v451
    %v453 = vpop.f32.mrf.mxu0
    %v454 = vadd.f32 %v250, %v453
    %v455 = vpop.f32.mrf.mxu0
    %v456 = vadd.f32 %v254, %v455
    %457 = vdwg.mxu0
    %v458 = vld [vmem:[#allocation2] sm:$0xff]
    %v459 = vld [vmem:[#allocation2 + $0x8] sm:$0xff]
    %v460 = vld [vmem:[#allocation2 + $0x10] sm:$0xff]
    %v461 = vld [vmem:[#allocation2 + $0x18] sm:$0xff]
    %v462 = vld [vmem:[#allocation2 + $0x20] sm:$0xff]
    %v463 = vld [vmem:[#allocation2 + $0x28] sm:$0xff]
    %v464 = vld [vmem:[#allocation2 + $0x30] sm:$0xff]
    %v465 = vld [vmem:[#allocation2 + $0x38] sm:$0xff]
    %v466 = vld [vmem:[#allocation2 + $0x40] sm:$0xff]
    %v467 = vld [vmem:[#allocation2 + $0x48] sm:$0xff]
    %v468 = vld [vmem:[#allocation2 + $0x50] sm:$0xff]
    %v469 = vld [vmem:[#allocation2 + $0x58] sm:$0xff]
    %v470 = vld [vmem:[#allocation2 + $0x60] sm:$0xff]
    %v471 = vld [vmem:[#allocation2 + $0x68] sm:$0xff]
    %v472 = vld [vmem:[#allocation2 + $0x70] sm:$0xff]
    %v473 = vld [vmem:[#allocation2 + $0x78] sm:$0xff]
    %v474 = vld [vmem:[#allocation2 + $0x80] sm:$0xff]
    %v475 = vld [vmem:[#allocation2 + $0x88] sm:$0xff]
    %v476 = vld [vmem:[#allocation2 + $0x90] sm:$0xff]
    %v477 = vld [vmem:[#allocation2 + $0x98] sm:$0xff]
    %v478 = vld [vmem:[#allocation2 + $0xa0] sm:$0xff]
    %v479 = vld [vmem:[#allocation2 + $0xa8] sm:$0xff]
    %v480 = vld [vmem:[#allocation2 + $0xb0] sm:$0xff]
    %v481 = vld [vmem:[#allocation2 + $0xb8] sm:$0xff]
    %v482 = vld [vmem:[#allocation2 + $0xc0] sm:$0xff]
    %v483 = vld [vmem:[#allocation2 + $0xc8] sm:$0xff]
    %v484 = vld [vmem:[#allocation2 + $0xd0] sm:$0xff]
    %v485 = vld [vmem:[#allocation2 + $0xd8] sm:$0xff]
    %v486 = vld [vmem:[#allocation2 + $0xe0] sm:$0xff]
    %v487 = vld [vmem:[#allocation2 + $0xe8] sm:$0xff]
    %v488 = vld [vmem:[#allocation2 + $0xf0] sm:$0xff]
    %v489 = vld [vmem:[#allocation2 + $0xf8] sm:$0xff]
    %v490 = vld [vmem:[%s5] sm:$0xf]
    %v491 = vld [vmem:[%s5 + $0x4] sm:$0xf]
    %v492 = vld [vmem:[%s5 + $0x8] sm:$0xf]
    %v493 = vld [vmem:[%s5 + $0xc] sm:$0xf]
    %v494 = vld [vmem:[%s5 + $0x10] sm:$0xf]
    %v495 = vld [vmem:[%s5 + $0x14] sm:$0xf]
    %v496 = vld [vmem:[%s5 + $0x18] sm:$0xf]
    %v497 = vld [vmem:[%s5 + $0x1c] sm:$0xf]
    %v498 = vld [vmem:[%s5 + $0x20] sm:$0xf]
    %v499 = vld [vmem:[%s5 + $0x24] sm:$0xf]
    %v500 = vld [vmem:[%s5 + $0x28] sm:$0xf]
    %v501 = vld [vmem:[%s5 + $0x2c] sm:$0xf]
    %v502 = vld [vmem:[%s5 + $0x30] sm:$0xf]
    %v503 = vld [vmem:[%s5 + $0x34] sm:$0xf]
    %v504 = vld [vmem:[%s5 + $0x38] sm:$0xf]
    %v505 = vld [vmem:[%s5 + $0x3c] sm:$0xf]
    %v506 = vld [vmem:[%s6] sm:$0x1]
    %v539 = vunpack.c.l.b16 %v458
    %v540 = vunpack.c.h.b16 %v458
    %v541 = vunpack.c.l.b16 %v459
    %v542 = vunpack.c.h.b16 %v459
    %v543 = vunpack.c.l.b16 %v460
    %v544 = vunpack.c.h.b16 %v460
    %v545 = vunpack.c.l.b16 %v461
    %v546 = vunpack.c.h.b16 %v461
    %v547 = vunpack.c.l.b16 %v462
    %v548 = vunpack.c.h.b16 %v462
    %v549 = vunpack.c.l.b16 %v463
    %v550 = vunpack.c.h.b16 %v463
    %v551 = vunpack.c.l.b16 %v464
    %v552 = vunpack.c.h.b16 %v464
    %v553 = vunpack.c.l.b16 %v465
    %v554 = vunpack.c.h.b16 %v465
    %v555 = vunpack.c.l.b16 %v466
    %v556 = vunpack.c.h.b16 %v466
    %v557 = vunpack.c.l.b16 %v467
    %v558 = vunpack.c.h.b16 %v467
    %v559 = vunpack.c.l.b16 %v468
    %v560 = vunpack.c.h.b16 %v468
    %v561 = vunpack.c.l.b16 %v469
    %v562 = vunpack.c.h.b16 %v469
    %v563 = vunpack.c.l.b16 %v470
    %v564 = vunpack.c.h.b16 %v470
    %v565 = vunpack.c.l.b16 %v471
    %v566 = vunpack.c.h.b16 %v471
    %v567 = vunpack.c.l.b16 %v472
    %v568 = vunpack.c.h.b16 %v472
    %v569 = vunpack.c.l.b16 %v473
    %v570 = vunpack.c.h.b16 %v473
    %v571 = vunpack.c.l.b16 %v474
    %v572 = vunpack.c.h.b16 %v474
    %v573 = vunpack.c.l.b16 %v475
    %v574 = vunpack.c.h.b16 %v475
    %v575 = vunpack.c.l.b16 %v476
    %v576 = vunpack.c.h.b16 %v476
    %v577 = vunpack.c.l.b16 %v477
    %v578 = vunpack.c.h.b16 %v477
    %v579 = vunpack.c.l.b16 %v478
    %v580 = vunpack.c.h.b16 %v478
    %v581 = vunpack.c.l.b16 %v479
    %v582 = vunpack.c.h.b16 %v479
    %v583 = vunpack.c.l.b16 %v480
    %v584 = vunpack.c.h.b16 %v480
    %v585 = vunpack.c.l.b16 %v481
    %v586 = vunpack.c.h.b16 %v481
    %v587 = vunpack.c.l.b16 %v482
    %v588 = vunpack.c.h.b16 %v482
    %v589 = vunpack.c.l.b16 %v483
    %v590 = vunpack.c.h.b16 %v483
    %v591 = vunpack.c.l.b16 %v484
    %v592 = vunpack.c.h.b16 %v484
    %v593 = vunpack.c.l.b16 %v485
    %v594 = vunpack.c.h.b16 %v485
    %v595 = vunpack.c.l.b16 %v486
    %v596 = vunpack.c.h.b16 %v486
    %v597 = vunpack.c.l.b16 %v487
    %v598 = vunpack.c.h.b16 %v487
    %v599 = vunpack.c.l.b16 %v488
    %v600 = vunpack.c.h.b16 %v488
    %v601 = vunpack.c.l.b16 %v489
    %v602 = vunpack.c.h.b16 %v489
    %v603 = vpack.c.b16 %v543, %v539
    %v604 = vpack.c.b16 %v544, %v540
    %v605 = vpack.c.b16 %v545, %v541
    %v606 = vpack.c.b16 %v546, %v542
    %v607 = vpack.c.b16 %v551, %v547
    %v608 = vpack.c.b16 %v552, %v548
    %v609 = vpack.c.b16 %v553, %v549
    %v610 = vpack.c.b16 %v554, %v550
    %v611 = vpack.c.b16 %v559, %v555
    %v612 = vpack.c.b16 %v560, %v556
    %v613 = vpack.c.b16 %v561, %v557
    %v614 = vpack.c.b16 %v562, %v558
    %v615 = vpack.c.b16 %v567, %v563
    %v616 = vpack.c.b16 %v568, %v564
    %v617 = vpack.c.b16 %v569, %v565
    %v618 = vpack.c.b16 %v570, %v566
    %v619 = vpack.c.b16 %v575, %v571
    %v620 = vpack.c.b16 %v576, %v572
    %v621 = vpack.c.b16 %v577, %v573
    %v622 = vpack.c.b16 %v578, %v574
    %v623 = vpack.c.b16 %v583, %v579
    %v624 = vpack.c.b16 %v584, %v580
    %v625 = vpack.c.b16 %v585, %v581
    %v626 = vpack.c.b16 %v586, %v582
    %v627 = vpack.c.b16 %v591, %v587
    %v628 = vpack.c.b16 %v592, %v588
    %v629 = vpack.c.b16 %v593, %v589
    %v630 = vpack.c.b16 %v594, %v590
    %v631 = vpack.c.b16 %v599, %v595
    %v632 = vpack.c.b16 %v600, %v596
    %v633 = vpack.c.b16 %v601, %v597
    %v634 = vpack.c.b16 %v602, %v598
    %667 = vmatprep.subr.bf16.mxu0 %v632
    %668 = vmatpush1.bf16.msra.mxu0 %v631
    %669 = vmatprep.subr.bf16.mxu0 %v628
    %670 = vmatpush1.bf16.msra.mxu0 %v627
    %671 = vmatprep.subr.bf16.mxu0 %v624
    %672 = vmatpush1.bf16.msra.mxu0 %v623
    %673 = vmatprep.subr.bf16.mxu0 %v620
    %674 = vmatpush1.bf16.msra.mxu0 %v619
    %675 = vmatprep.subr.bf16.mxu0 %v616
    %676 = vmatpush1.bf16.msra.mxu0 %v615
    %677 = vmatprep.subr.bf16.mxu0 %v612
    %678 = vmatpush1.bf16.msra.mxu0 %v611
    %679 = vmatprep.subr.bf16.mxu0 %v608
    %680 = vmatpush1.bf16.msra.mxu0 %v607
    %681 = vmatprep.subr.bf16.mxu0 %v604
    %682 = vmatpush1.bf16.msra.mxu0 %v603
    %683 = vmatprep.subr.bf16.mxu0 0
    %684 = vmatpush2.bf16.msra.mxu0 0
    %685 = vmatprep.subr.bf16.mxu0 0
    %686 = vmatpush2.bf16.msra.mxu0 0
    %687 = vmatprep.subr.bf16.mxu0 0
    %688 = vmatpush2.bf16.msra.mxu0 0
    %689 = vmatprep.subr.bf16.mxu0 0
    %690 = vmatpush2.bf16.msra.mxu0 0
    %691 = vmatprep.subr.bf16.mxu0 0
    %692 = vmatpush2.bf16.msra.mxu0 0
    %693 = vmatprep.subr.bf16.mxu0 0
    %694 = vmatpush2.bf16.msra.mxu0 0
    %695 = vmatprep.subr.bf16.mxu0 0
    %696 = vmatpush2.bf16.msra.mxu0 0
    %697 = vmatprep.subr.bf16.mxu0 0
    %698 = vmatpush2.bf16.msra.mxu0 0
    %699 = vmatprep.mubr.bf16.mxu0 0
    %700 = vmatmul.mubr.bf16.gmra.mxu0 0
    %v701 = vpop.f32.mrf.mxu0
    %v702 = vadd.f32 0.0, %v701
    %v703 = vpop.f32.mrf.mxu0
    %v704 = vadd.f32 0.0, %v703
    %v705 = vpop.f32.mrf.mxu0
    %v706 = vpop.f32.mrf.mxu0
    %707 = vdwg.mxu0
    %708 = vmatprep.subr.bf16.mxu0 %v634
    %709 = vmatpush1.bf16.msra.mxu0 %v633
    %710 = vmatprep.subr.bf16.mxu0 %v630
    %711 = vmatpush1.bf16.msra.mxu0 %v629
    %712 = vmatprep.subr.bf16.mxu0 %v626
    %713 = vmatpush1.bf16.msra.mxu0 %v625
    %714 = vmatprep.subr.bf16.mxu0 %v622
    %715 = vmatpush1.bf16.msra.mxu0 %v621
    %716 = vmatprep.subr.bf16.mxu0 %v618
    %717 = vmatpush1.bf16.msra.mxu0 %v617
    %718 = vmatprep.subr.bf16.mxu0 %v614
    %719 = vmatpush1.bf16.msra.mxu0 %v613
    %720 = vmatprep.subr.bf16.mxu0 %v610
    %721 = vmatpush1.bf16.msra.mxu0 %v609
    %722 = vmatprep.subr.bf16.mxu0 %v606
    %723 = vmatpush1.bf16.msra.mxu0 %v605
    %724 = vmatprep.subr.bf16.mxu0 0
    %725 = vmatpush2.bf16.msra.mxu0 0
    %726 = vmatprep.subr.bf16.mxu0 0
    %727 = vmatpush2.bf16.msra.mxu0 0
    %728 = vmatprep.subr.bf16.mxu0 0
    %729 = vmatpush2.bf16.msra.mxu0 0
    %730 = vmatprep.subr.bf16.mxu0 0
    %731 = vmatpush2.bf16.msra.mxu0 0
    %732 = vmatprep.subr.bf16.mxu0 0
    %733 = vmatpush2.bf16.msra.mxu0 0
    %734 = vmatprep.subr.bf16.mxu0 0
    %735 = vmatpush2.bf16.msra.mxu0 0
    %736 = vmatprep.subr.bf16.mxu0 0
    %737 = vmatpush2.bf16.msra.mxu0 0
    %738 = vmatprep.subr.bf16.mxu0 0
    %739 = vmatpush2.bf16.msra.mxu0 0
    %740 = vmatprep.mubr.bf16.mxu0 0
    %741 = vmatmul.mubr.bf16.gmra.mxu0 0
    %v742 = vpop.f32.mrf.mxu0
    %v743 = vadd.f32 0.0, %v742
    %v744 = vpop.f32.mrf.mxu0
    %v745 = vadd.f32 0.0, %v744
    %v746 = vpop.f32.mrf.mxu0
    %v747 = vpop.f32.mrf.mxu0
    %748 = vdwg.mxu0
    %v749 = vadd.f32 %v347, %v702
    %v750 = vadd.f32 %v349, %v704
    %v751 = vadd.f32 %v420, %v743
    %v752 = vadd.f32 %v422, %v745
    %v753 = vxor.u32 %v749, 2147483648
    %v754 = vmul.f32 %v753, 1.442695
    %v755 = vpow.pop %v754
    %v756 = vadd.f32 %v755, 1.0
    %v757 = vrcp.pop %v756
    %v758 = vmul.f32 1.0, %v757
    %v759 = vxor.u32 %v750, 2147483648
    %v760 = vmul.f32 %v759, 1.442695
    %v761 = vpow.pop %v760
    %v762 = vadd.f32 %v761, 1.0
    %v763 = vrcp.pop %v762
    %v764 = vmul.f32 1.0, %v763
    %v765 = vtanh.pop %v751
    %v766 = vxor.u32 %v752, 2147483648
    %v767 = vmul.f32 %v766, 1.442695
    %v768 = vpow.pop %v767
    %v769 = vadd.f32 %v768, 1.0
    %v770 = vrcp.pop %v769
    %v771 = vmul.f32 1.0, %v770
    %v772 = vmul.f32 %v764, 0.0
    %v773 = vmul.f32 %v758, %v765
    %v774 = vadd.f32 %v772, %v773
    %v775 = vtanh.pop %v774
    %v776 = vmul.f32 %v771, %v775
    %v777 = vpack.c.bf16 %v776, %v776
    %v779 = vlaneseq
    %v780 = vshrl.u32 %v779, 7
    %v781 = vsub.s32 0, %v780
    %v782 = vrot.slane %v506, %v781
    %v800 = vunpack.c.l.b16 %v490
    %v801 = vunpack.c.l.b16 %v491
    %v802 = vunpack.c.l.b16 %v492
    %v803 = vunpack.c.l.b16 %v493
    %v804 = vunpack.c.l.b16 %v494
    %v805 = vunpack.c.l.b16 %v495
    %v806 = vunpack.c.l.b16 %v496
    %v807 = vunpack.c.l.b16 %v497
    %v808 = vunpack.c.l.b16 %v498
    %v809 = vunpack.c.l.b16 %v499
    %v810 = vunpack.c.l.b16 %v500
    %v811 = vunpack.c.l.b16 %v501
    %v812 = vunpack.c.l.b16 %v502
    %v813 = vunpack.c.l.b16 %v503
    %v814 = vunpack.c.l.b16 %v504
    %v815 = vunpack.c.l.b16 %v505
    %v816 = vpack.c.b16 %v801, %v800
    %v817 = vpack.c.b16 %v803, %v802
    %v818 = vpack.c.b16 %v805, %v804
    %v819 = vpack.c.b16 %v807, %v806
    %v820 = vpack.c.b16 %v809, %v808
    %v821 = vpack.c.b16 %v811, %v810
    %v822 = vpack.c.b16 %v813, %v812
    %v823 = vpack.c.b16 %v815, %v814
    %832 = vmatprep.subr.bf16.mxu0 0
    %833 = vmatpush1.bf16.msra.mxu0 %v823
    %834 = vmatprep.subr.bf16.mxu0 0
    %835 = vmatpush1.bf16.msra.mxu0 %v822
    %836 = vmatprep.subr.bf16.mxu0 0
    %837 = vmatpush1.bf16.msra.mxu0 %v821
    %838 = vmatprep.subr.bf16.mxu0 0
    %839 = vmatpush1.bf16.msra.mxu0 %v820
    %840 = vmatprep.subr.bf16.mxu0 0
    %841 = vmatpush1.bf16.msra.mxu0 %v819
    %842 = vmatprep.subr.bf16.mxu0 0
    %843 = vmatpush1.bf16.msra.mxu0 %v818
    %844 = vmatprep.subr.bf16.mxu0 0
    %845 = vmatpush1.bf16.msra.mxu0 %v817
    %846 = vmatprep.subr.bf16.mxu0 0
    %847 = vmatpush1.bf16.msra.mxu0 %v816
    %848 = vmatprep.subr.bf16.mxu0 0
    %849 = vmatpush2.bf16.msra.mxu0 0
    %850 = vmatprep.subr.bf16.mxu0 0
    %851 = vmatpush2.bf16.msra.mxu0 0
    %852 = vmatprep.subr.bf16.mxu0 0
    %853 = vmatpush2.bf16.msra.mxu0 0
    %854 = vmatprep.subr.bf16.mxu0 0
    %855 = vmatpush2.bf16.msra.mxu0 0
    %856 = vmatprep.subr.bf16.mxu0 0
    %857 = vmatpush2.bf16.msra.mxu0 0
    %858 = vmatprep.subr.bf16.mxu0 0
    %859 = vmatpush2.bf16.msra.mxu0 0
    %860 = vmatprep.subr.bf16.mxu0 0
    %861 = vmatpush2.bf16.msra.mxu0 0
    %862 = vmatprep.subr.bf16.mxu0 0
    %863 = vmatpush2.bf16.msra.mxu0 0
    %864 = vmatprep.mubr.bf16.mxu0 0
    %865 = vmatmul.mubr.bf16.gmra.mxu0 %v777
    %v866 = vpop.f32.mrf.mxu0
    %v867 = vadd.f32 %v782, %v866
    %v868 = vpop.f32.mrf.mxu0
    %v869 = vpop.f32.mrf.mxu0
    %v870 = vpop.f32.mrf.mxu0
    %871 = vdwg.mxu0
    %872 = vst [vmem:[#allocation5] sm:$0xff] %v867
    %873 = vmatprep.subr.bf16.mxu0 %v632
    %874 = vmatpush1.bf16.msra.mxu0 %v631
    %875 = vmatprep.subr.bf16.mxu0 %v628
    %876 = vmatpush1.bf16.msra.mxu0 %v627
    %877 = vmatprep.subr.bf16.mxu0 %v624
    %878 = vmatpush1.bf16.msra.mxu0 %v623
    %879 = vmatprep.subr.bf16.mxu0 %v620
    %880 = vmatpush1.bf16.msra.mxu0 %v619
    %881 = vmatprep.subr.bf16.mxu0 %v616
    %882 = vmatpush1.bf16.msra.mxu0 %v615
    %883 = vmatprep.subr.bf16.mxu0 %v612
    %884 = vmatpush1.bf16.msra.mxu0 %v611
    %885 = vmatprep.subr.bf16.mxu0 %v608
    %886 = vmatpush1.bf16.msra.mxu0 %v607
    %887 = vmatprep.subr.bf16.mxu0 %v604
    %888 = vmatpush1.bf16.msra.mxu0 %v603
    %889 = vmatprep.subr.bf16.mxu0 0
    %890 = vmatpush2.bf16.msra.mxu0 0
    %891 = vmatprep.subr.bf16.mxu0 0
    %892 = vmatpush2.bf16.msra.mxu0 0
    %893 = vmatprep.subr.bf16.mxu0 0
    %894 = vmatpush2.bf16.msra.mxu0 0
    %895 = vmatprep.subr.bf16.mxu0 0
    %896 = vmatpush2.bf16.msra.mxu0 0
    %897 = vmatprep.subr.bf16.mxu0 0
    %898 = vmatpush2.bf16.msra.mxu0 0
    %899 = vmatprep.subr.bf16.mxu0 0
    %900 = vmatpush2.bf16.msra.mxu0 0
    %901 = vmatprep.subr.bf16.mxu0 0
    %902 = vmatpush2.bf16.msra.mxu0 0
    %903 = vmatprep.subr.bf16.mxu0 0
    %904 = vmatpush2.bf16.msra.mxu0 0
    %905 = vmatprep.mubr.bf16.mxu0 0
    %906 = vmatmul.mubr.bf16.gmra.mxu0 %v777
    %v907 = vpop.f32.mrf.mxu0
    %v908 = vadd.f32 0.0, %v907
    %v909 = vpop.f32.mrf.mxu0
    %v910 = vadd.f32 0.0, %v909
    %v911 = vpop.f32.mrf.mxu0
    %v912 = vpop.f32.mrf.mxu0
    %913 = vdwg.mxu0
    %914 = vmatprep.subr.bf16.mxu0 %v634
    %915 = vmatpush1.bf16.msra.mxu0 %v633
    %916 = vmatprep.subr.bf16.mxu0 %v630
    %917 = vmatpush1.bf16.msra.mxu0 %v629
    %918 = vmatprep.subr.bf16.mxu0 %v626
    %919 = vmatpush1.bf16.msra.mxu0 %v625
    %920 = vmatprep.subr.bf16.mxu0 %v622
    %921 = vmatpush1.bf16.msra.mxu0 %v621
    %922 = vmatprep.subr.bf16.mxu0 %v618
    %923 = vmatpush1.bf16.msra.mxu0 %v617
    %924 = vmatprep.subr.bf16.mxu0 %v614
    %925 = vmatpush1.bf16.msra.mxu0 %v613
    %926 = vmatprep.subr.bf16.mxu0 %v610
    %927 = vmatpush1.bf16.msra.mxu0 %v609
    %928 = vmatprep.subr.bf16.mxu0 %v606
    %929 = vmatpush1.bf16.msra.mxu0 %v605
    %930 = vmatprep.subr.bf16.mxu0 0
    %931 = vmatpush2.bf16.msra.mxu0 0
    %932 = vmatprep.subr.bf16.mxu0 0
    %933 = vmatpush2.bf16.msra.mxu0 0
    %934 = vmatprep.subr.bf16.mxu0 0
    %935 = vmatpush2.bf16.msra.mxu0 0
    %936 = vmatprep.subr.bf16.mxu0 0
    %937 = vmatpush2.bf16.msra.mxu0 0
    %938 = vmatprep.subr.bf16.mxu0 0
    %939 = vmatpush2.bf16.msra.mxu0 0
    %940 = vmatprep.subr.bf16.mxu0 0
    %941 = vmatpush2.bf16.msra.mxu0 0
    %942 = vmatprep.subr.bf16.mxu0 0
    %943 = vmatpush2.bf16.msra.mxu0 0
    %944 = vmatprep.subr.bf16.mxu0 0
    %945 = vmatpush2.bf16.msra.mxu0 0
    %946 = vmatprep.mubr.bf16.mxu0 0
    %947 = vmatmul.mubr.bf16.gmra.mxu0 %v777
    %v948 = vpop.f32.mrf.mxu0
    %v949 = vadd.f32 0.0, %v948
    %v950 = vpop.f32.mrf.mxu0
    %v951 = vadd.f32 0.0, %v950
    %v952 = vpop.f32.mrf.mxu0
    %v953 = vpop.f32.mrf.mxu0
    %954 = vdwg.mxu0
    %v955 = vadd.f32 %v351, %v908
    %v956 = vadd.f32 %v353, %v910
    %v957 = vadd.f32 %v424, %v949
    %v958 = vadd.f32 %v426, %v951
    %v959 = vxor.u32 %v955, 2147483648
    %v960 = vmul.f32 %v959, 1.442695
    %v961 = vpow.pop %v960
    %v962 = vadd.f32 %v961, 1.0
    %v963 = vrcp.pop %v962
    %v964 = vmul.f32 1.0, %v963
    %v965 = vxor.u32 %v956, 2147483648
    %v966 = vmul.f32 %v965, 1.442695
    %v967 = vpow.pop %v966
    %v968 = vadd.f32 %v967, 1.0
    %v969 = vrcp.pop %v968
    %v970 = vmul.f32 1.0, %v969
    %v971 = vtanh.pop %v957
    %v972 = vxor.u32 %v958, 2147483648
    %v973 = vmul.f32 %v972, 1.442695
    %v974 = vpow.pop %v973
    %v975 = vadd.f32 %v974, 1.0
    %v976 = vrcp.pop %v975
    %v977 = vmul.f32 1.0, %v976
    %v978 = vmul.f32 %v970, %v774
    %v979 = vmul.f32 %v964, %v971
    %v980 = vadd.f32 %v978, %v979
    %v981 = vtanh.pop %v980
    %v982 = vmul.f32 %v977, %v981
    %v983 = vpack.c.bf16 %v982, %v982
    %984 = vmatprep.subr.bf16.mxu0 0
    %985 = vmatpush1.bf16.msra.mxu0 %v823
    %986 = vmatprep.subr.bf16.mxu0 0
    %987 = vmatpush1.bf16.msra.mxu0 %v822
    %988 = vmatprep.subr.bf16.mxu0 0
    %989 = vmatpush1.bf16.msra.mxu0 %v821
    %990 = vmatprep.subr.bf16.mxu0 0
    %991 = vmatpush1.bf16.msra.mxu0 %v820
    %992 = vmatprep.subr.bf16.mxu0 0
    %993 = vmatpush1.bf16.msra.mxu0 %v819
    %994 = vmatprep.subr.bf16.mxu0 0
    %995 = vmatpush1.bf16.msra.mxu0 %v818
    %996 = vmatprep.subr.bf16.mxu0 0
    %997 = vmatpush1.bf16.msra.mxu0 %v817
    %998 = vmatprep.subr.bf16.mxu0 0
    %999 = vmatpush1.bf16.msra.mxu0 %v816
    %1000 = vmatprep.subr.bf16.mxu0 0
    %1001 = vmatpush2.bf16.msra.mxu0 0
    %1002 = vmatprep.subr.bf16.mxu0 0
    %1003 = vmatpush2.bf16.msra.mxu0 0
    %1004 = vmatprep.subr.bf16.mxu0 0
    %1005 = vmatpush2.bf16.msra.mxu0 0
    %1006 = vmatprep.subr.bf16.mxu0 0
    %1007 = vmatpush2.bf16.msra.mxu0 0
    %1008 = vmatprep.subr.bf16.mxu0 0
    %1009 = vmatpush2.bf16.msra.mxu0 0
    %1010 = vmatprep.subr.bf16.mxu0 0
    %1011 = vmatpush2.bf16.msra.mxu0 0
    %1012 = vmatprep.subr.bf16.mxu0 0
    %1013 = vmatpush2.bf16.msra.mxu0 0
    %1014 = vmatprep.subr.bf16.mxu0 0
    %1015 = vmatpush2.bf16.msra.mxu0 0
    %1016 = vmatprep.mubr.bf16.mxu0 0
    %1017 = vmatmul.mubr.bf16.gmra.mxu0 %v983
    %v1018 = vpop.f32.mrf.mxu0
    %v1019 = vadd.f32 %v782, %v1018
    %v1020 = vpop.f32.mrf.mxu0
    %v1021 = vpop.f32.mrf.mxu0
    %v1022 = vpop.f32.mrf.mxu0
    %1023 = vdwg.mxu0
    %s1024 = scalar_lea.vmem [#allocation5], 8
    %1025 = vst [vmem:[%s1024] sm:$0xff] %v1019
    %1026 = vmatprep.subr.bf16.mxu0 %v632
    %1027 = vmatpush1.bf16.msra.mxu0 %v631
    %1028 = vmatprep.subr.bf16.mxu0 %v628
    %1029 = vmatpush1.bf16.msra.mxu0 %v627
    %1030 = vmatprep.subr.bf16.mxu0 %v624
    %1031 = vmatpush1.bf16.msra.mxu0 %v623
    %1032 = vmatprep.subr.bf16.mxu0 %v620
    %1033 = vmatpush1.bf16.msra.mxu0 %v619
    %1034 = vmatprep.subr.bf16.mxu0 %v616
    %1035 = vmatpush1.bf16.msra.mxu0 %v615
    %1036 = vmatprep.subr.bf16.mxu0 %v612
    %1037 = vmatpush1.bf16.msra.mxu0 %v611
    %1038 = vmatprep.subr.bf16.mxu0 %v608
    %1039 = vmatpush1.bf16.msra.mxu0 %v607
    %1040 = vmatprep.subr.bf16.mxu0 %v604
    %1041 = vmatpush1.bf16.msra.mxu0 %v603
    %1042 = vmatprep.subr.bf16.mxu0 0
    %1043 = vmatpush2.bf16.msra.mxu0 0
    %1044 = vmatprep.subr.bf16.mxu0 0
    %1045 = vmatpush2.bf16.msra.mxu0 0
    %1046 = vmatprep.subr.bf16.mxu0 0
    %1047 = vmatpush2.bf16.msra.mxu0 0
    %1048 = vmatprep.subr.bf16.mxu0 0
    %1049 = vmatpush2.bf16.msra.mxu0 0
    %1050 = vmatprep.subr.bf16.mxu0 0
    %1051 = vmatpush2.bf16.msra.mxu0 0
    %1052 = vmatprep.subr.bf16.mxu0 0
    %1053 = vmatpush2.bf16.msra.mxu0 0
    %1054 = vmatprep.subr.bf16.mxu0 0
    %1055 = vmatpush2.bf16.msra.mxu0 0
    %1056 = vmatprep.subr.bf16.mxu0 0
    %1057 = vmatpush2.bf16.msra.mxu0 0
    %1058 = vmatprep.mubr.bf16.mxu0 0
    %1059 = vmatmul.mubr.bf16.gmra.mxu0 %v983
    %v1060 = vpop.f32.mrf.mxu0
    %v1061 = vadd.f32 0.0, %v1060
    %v1062 = vpop.f32.mrf.mxu0
    %v1063 = vadd.f32 0.0, %v1062
    %v1064 = vpop.f32.mrf.mxu0
    %v1065 = vpop.f32.mrf.mxu0
    %1066 = vdwg.mxu0
    %1067 = vmatprep.subr.bf16.mxu0 %v634
    %1068 = vmatpush1.bf16.msra.mxu0 %v633
    %1069 = vmatprep.subr.bf16.mxu0 %v630
    %1070 = vmatpush1.bf16.msra.mxu0 %v629
    %1071 = vmatprep.subr.bf16.mxu0 %v626
    %1072 = vmatpush1.bf16.msra.mxu0 %v625
    %1073 = vmatprep.subr.bf16.mxu0 %v622
    %1074 = vmatpush1.bf16.msra.mxu0 %v621
    %1075 = vmatprep.subr.bf16.mxu0 %v618
    %1076 = vmatpush1.bf16.msra.mxu0 %v617
    %1077 = vmatprep.subr.bf16.mxu0 %v614
    %1078 = vmatpush1.bf16.msra.mxu0 %v613
    %1079 = vmatprep.subr.bf16.mxu0 %v610
    %1080 = vmatpush1.bf16.msra.mxu0 %v609
    %1081 = vmatprep.subr.bf16.mxu0 %v606
    %1082 = vmatpush1.bf16.msra.mxu0 %v605
    %1083 = vmatprep.subr.bf16.mxu0 0
    %1084 = vmatpush2.bf16.msra.mxu0 0
    %1085 = vmatprep.subr.bf16.mxu0 0
    %1086 = vmatpush2.bf16.msra.mxu0 0
    %1087 = vmatprep.subr.bf16.mxu0 0
    %1088 = vmatpush2.bf16.msra.mxu0 0
    %1089 = vmatprep.subr.bf16.mxu0 0
    %1090 = vmatpush2.bf16.msra.mxu0 0
    %1091 = vmatprep.subr.bf16.mxu0 0
    %1092 = vmatpush2.bf16.msra.mxu0 0
    %1093 = vmatprep.subr.bf16.mxu0 0
    %1094 = vmatpush2.bf16.msra.mxu0 0
    %1095 = vmatprep.subr.bf16.mxu0 0
    %1096 = vmatpush2.bf16.msra.mxu0 0
    %1097 = vmatprep.subr.bf16.mxu0 0
    %1098 = vmatpush2.bf16.msra.mxu0 0
    %1099 = vmatprep.mubr.bf16.mxu0 0
    %1100 = vmatmul.mubr.bf16.gmra.mxu0 %v983
    %v1101 = vpop.f32.mrf.mxu0
    %v1102 = vadd.f32 0.0, %v1101
    %v1103 = vpop.f32.mrf.mxu0
    %v1104 = vadd.f32 0.0, %v1103
    %v1105 = vpop.f32.mrf.mxu0
    %v1106 = vpop.f32.mrf.mxu0
    %1107 = vdwg.mxu0
    %v1108 = vadd.f32 %v357, %v1061
    %v1109 = vadd.f32 %v359, %v1063
    %v1110 = vadd.f32 %v430, %v1102
    %v1111 = vadd.f32 %v432, %v1104
    %v1112 = vxor.u32 %v1108, 2147483648
    %v1113 = vmul.f32 %v1112, 1.442695
    %v1114 = vpow.pop %v1113
    %v1115 = vadd.f32 %v1114, 1.0
    %v1116 = vrcp.pop %v1115
    %v1117 = vmul.f32 1.0, %v1116
    %v1118 = vxor.u32 %v1109, 2147483648
    %v1119 = vmul.f32 %v1118, 1.442695
    %v1120 = vpow.pop %v1119
    %v1121 = vadd.f32 %v1120, 1.0
    %v1122 = vrcp.pop %v1121
    %v1123 = vmul.f32 1.0, %v1122
    %v1124 = vtanh.pop %v1110
    %v1125 = vxor.u32 %v1111, 2147483648
    %v1126 = vmul.f32 %v1125, 1.442695
    %v1127 = vpow.pop %v1126
    %v1128 = vadd.f32 %v1127, 1.0
    %v1129 = vrcp.pop %v1128
    %v1130 = vmul.f32 1.0, %v1129
    %v1131 = vmul.f32 %v1123, %v980
    %v1132 = vmul.f32 %v1117, %v1124
    %v1133 = vadd.f32 %v1131, %v1132
    %v1134 = vtanh.pop %v1133
    %v1135 = vmul.f32 %v1130, %v1134
    %v1136 = vpack.c.bf16 %v1135, %v1135
    %1137 = vmatprep.subr.bf16.mxu0 0
    %1138 = vmatpush1.bf16.msra.mxu0 %v823
    %1139 = vmatprep.subr.bf16.mxu0 0
    %1140 = vmatpush1.bf16.msra.mxu0 %v822
    %1141 = vmatprep.subr.bf16.mxu0 0
    %1142 = vmatpush1.bf16.msra.mxu0 %v821
    %1143 = vmatprep.subr.bf16.mxu0 0
    %1144 = vmatpush1.bf16.msra.mxu0 %v820
    %1145 = vmatprep.subr.bf16.mxu0 0
    %1146 = vmatpush1.bf16.msra.mxu0 %v819
    %1147 = vmatprep.subr.bf16.mxu0 0
    %1148 = vmatpush1.bf16.msra.mxu0 %v818
    %1149 = vmatprep.subr.bf16.mxu0 0
    %1150 = vmatpush1.bf16.msra.mxu0 %v817
    %1151 = vmatprep.subr.bf16.mxu0 0
    %1152 = vmatpush1.bf16.msra.mxu0 %v816
    %1153 = vmatprep.subr.bf16.mxu0 0
    %1154 = vmatpush2.bf16.msra.mxu0 0
    %1155 = vmatprep.subr.bf16.mxu0 0
    %1156 = vmatpush2.bf16.msra.mxu0 0
    %1157 = vmatprep.subr.bf16.mxu0 0
    %1158 = vmatpush2.bf16.msra.mxu0 0
    %1159 = vmatprep.subr.bf16.mxu0 0
    %1160 = vmatpush2.bf16.msra.mxu0 0
    %1161 = vmatprep.subr.bf16.mxu0 0
    %1162 = vmatpush2.bf16.msra.mxu0 0
    %1163 = vmatprep.subr.bf16.mxu0 0
    %1164 = vmatpush2.bf16.msra.mxu0 0
    %1165 = vmatprep.subr.bf16.mxu0 0
    %1166 = vmatpush2.bf16.msra.mxu0 0
    %1167 = vmatprep.subr.bf16.mxu0 0
    %1168 = vmatpush2.bf16.msra.mxu0 0
    %1169 = vmatprep.mubr.bf16.mxu0 0
    %1170 = vmatmul.mubr.bf16.gmra.mxu0 %v1136
    %v1171 = vpop.f32.mrf.mxu0
    %v1172 = vadd.f32 %v782, %v1171
    %v1173 = vpop.f32.mrf.mxu0
    %v1174 = vpop.f32.mrf.mxu0
    %v1175 = vpop.f32.mrf.mxu0
    %1176 = vdwg.mxu0
    %s1177 = scalar_lea.vmem [#allocation5], 16
    %1178 = vst [vmem:[%s1177] sm:$0xff] %v1172
    %1179 = vmatprep.subr.bf16.mxu0 %v632
    %1180 = vmatpush1.bf16.msra.mxu0 %v631
    %1181 = vmatprep.subr.bf16.mxu0 %v628
    %1182 = vmatpush1.bf16.msra.mxu0 %v627
    %1183 = vmatprep.subr.bf16.mxu0 %v624
    %1184 = vmatpush1.bf16.msra.mxu0 %v623
    %1185 = vmatprep.subr.bf16.mxu0 %v620
    %1186 = vmatpush1.bf16.msra.mxu0 %v619
    %1187 = vmatprep.subr.bf16.mxu0 %v616
    %1188 = vmatpush1.bf16.msra.mxu0 %v615
    %1189 = vmatprep.subr.bf16.mxu0 %v612
    %1190 = vmatpush1.bf16.msra.mxu0 %v611
    %1191 = vmatprep.subr.bf16.mxu0 %v608
    %1192 = vmatpush1.bf16.msra.mxu0 %v607
    %1193 = vmatprep.subr.bf16.mxu0 %v604
    %1194 = vmatpush1.bf16.msra.mxu0 %v603
    %1195 = vmatprep.subr.bf16.mxu0 0
    %1196 = vmatpush2.bf16.msra.mxu0 0
    %1197 = vmatprep.subr.bf16.mxu0 0
    %1198 = vmatpush2.bf16.msra.mxu0 0
    %1199 = vmatprep.subr.bf16.mxu0 0
    %1200 = vmatpush2.bf16.msra.mxu0 0
    %1201 = vmatprep.subr.bf16.mxu0 0
    %1202 = vmatpush2.bf16.msra.mxu0 0
    %1203 = vmatprep.subr.bf16.mxu0 0
    %1204 = vmatpush2.bf16.msra.mxu0 0
    %1205 = vmatprep.subr.bf16.mxu0 0
    %1206 = vmatpush2.bf16.msra.mxu0 0
    %1207 = vmatprep.subr.bf16.mxu0 0
    %1208 = vmatpush2.bf16.msra.mxu0 0
    %1209 = vmatprep.subr.bf16.mxu0 0
    %1210 = vmatpush2.bf16.msra.mxu0 0
    %1211 = vmatprep.mubr.bf16.mxu0 0
    %1212 = vmatmul.mubr.bf16.gmra.mxu0 %v1136
    %v1213 = vpop.f32.mrf.mxu0
    %v1214 = vadd.f32 0.0, %v1213
    %v1215 = vpop.f32.mrf.mxu0
    %v1216 = vadd.f32 0.0, %v1215
    %v1217 = vpop.f32.mrf.mxu0
    %v1218 = vpop.f32.mrf.mxu0
    %1219 = vdwg.mxu0
    %1220 = vmatprep.subr.bf16.mxu0 %v634
    %1221 = vmatpush1.bf16.msra.mxu0 %v633
    %1222 = vmatprep.subr.bf16.mxu0 %v630
    %1223 = vmatpush1.bf16.msra.mxu0 %v629
    %1224 = vmatprep.subr.bf16.mxu0 %v626
    %1225 = vmatpush1.bf16.msra.mxu0 %v625
    %1226 = vmatprep.subr.bf16.mxu0 %v622
    %1227 = vmatpush1.bf16.msra.mxu0 %v621
    %1228 = vmatprep.subr.bf16.mxu0 %v618
    %1229 = vmatpush1.bf16.msra.mxu0 %v617
    %1230 = vmatprep.subr.bf16.mxu0 %v614
    %1231 = vmatpush1.bf16.msra.mxu0 %v613
    %1232 = vmatprep.subr.bf16.mxu0 %v610
    %1233 = vmatpush1.bf16.msra.mxu0 %v609
    %1234 = vmatprep.subr.bf16.mxu0 %v606
    %1235 = vmatpush1.bf16.msra.mxu0 %v605
    %1236 = vmatprep.subr.bf16.mxu0 0
    %1237 = vmatpush2.bf16.msra.mxu0 0
    %1238 = vmatprep.subr.bf16.mxu0 0
    %1239 = vmatpush2.bf16.msra.mxu0 0
    %1240 = vmatprep.subr.bf16.mxu0 0
    %1241 = vmatpush2.bf16.msra.mxu0 0
    %1242 = vmatprep.subr.bf16.mxu0 0
    %1243 = vmatpush2.bf16.msra.mxu0 0
    %1244 = vmatprep.subr.bf16.mxu0 0
    %1245 = vmatpush2.bf16.msra.mxu0 0
    %1246 = vmatprep.subr.bf16.mxu0 0
    %1247 = vmatpush2.bf16.msra.mxu0 0
    %1248 = vmatprep.subr.bf16.mxu0 0
    %1249 = vmatpush2.bf16.msra.mxu0 0
    %1250 = vmatprep.subr.bf16.mxu0 0
    %1251 = vmatpush2.bf16.msra.mxu0 0
    %1252 = vmatprep.mubr.bf16.mxu0 0
    %1253 = vmatmul.mubr.bf16.gmra.mxu0 %v1136
    %v1254 = vpop.f32.mrf.mxu0
    %v1255 = vadd.f32 0.0, %v1254
    %v1256 = vpop.f32.mrf.mxu0
    %v1257 = vadd.f32 0.0, %v1256
    %v1258 = vpop.f32.mrf.mxu0
    %v1259 = vpop.f32.mrf.mxu0
    %1260 = vdwg.mxu0
    %v1261 = vadd.f32 %v361, %v1214
    %v1262 = vadd.f32 %v363, %v1216
    %v1263 = vadd.f32 %v434, %v1255
    %v1264 = vadd.f32 %v436, %v1257
    %v1265 = vxor.u32 %v1261, 2147483648
    %v1266 = vmul.f32 %v1265, 1.442695
    %v1267 = vpow.pop %v1266
    %v1268 = vadd.f32 %v1267, 1.0
    %v1269 = vrcp.pop %v1268
    %v1270 = vmul.f32 1.0, %v1269
    %v1271 = vxor.u32 %v1262, 2147483648
    %v1272 = vmul.f32 %v1271, 1.442695
    %v1273 = vpow.pop %v1272
    %v1274 = vadd.f32 %v1273, 1.0
    %v1275 = vrcp.pop %v1274
    %v1276 = vmul.f32 1.0, %v1275
    %v1277 = vtanh.pop %v1263
    %v1278 = vxor.u32 %v1264, 2147483648
    %v1279 = vmul.f32 %v1278, 1.442695
    %v1280 = vpow.pop %v1279
    %v1281 = vadd.f32 %v1280, 1.0
    %v1282 = vrcp.pop %v1281
    %v1283 = vmul.f32 1.0, %v1282
    %v1284 = vmul.f32 %v1276, %v1133
    %v1285 = vmul.f32 %v1270, %v1277
    %v1286 = vadd.f32 %v1284, %v1285
    %v1287 = vtanh.pop %v1286
    %v1288 = vmul.f32 %v1283, %v1287
    %v1289 = vpack.c.bf16 %v1288, %v1288
    %1290 = vmatprep.subr.bf16.mxu0 0
    %1291 = vmatpush1.bf16.msra.mxu0 %v823
    %1292 = vmatprep.subr.bf16.mxu0 0
    %1293 = vmatpush1.bf16.msra.mxu0 %v822
    %1294 = vmatprep.subr.bf16.mxu0 0
    %1295 = vmatpush1.bf16.msra.mxu0 %v821
    %1296 = vmatprep.subr.bf16.mxu0 0
    %1297 = vmatpush1.bf16.msra.mxu0 %v820
    %1298 = vmatprep.subr.bf16.mxu0 0
    %1299 = vmatpush1.bf16.msra.mxu0 %v819
    %1300 = vmatprep.subr.bf16.mxu0 0
    %1301 = vmatpush1.bf16.msra.mxu0 %v818
    %1302 = vmatprep.subr.bf16.mxu0 0
    %1303 = vmatpush1.bf16.msra.mxu0 %v817
    %1304 = vmatprep.subr.bf16.mxu0 0
    %1305 = vmatpush1.bf16.msra.mxu0 %v816
    %1306 = vmatprep.subr.bf16.mxu0 0
    %1307 = vmatpush2.bf16.msra.mxu0 0
    %1308 = vmatprep.subr.bf16.mxu0 0
    %1309 = vmatpush2.bf16.msra.mxu0 0
    %1310 = vmatprep.subr.bf16.mxu0 0
    %1311 = vmatpush2.bf16.msra.mxu0 0
    %1312 = vmatprep.subr.bf16.mxu0 0
    %1313 = vmatpush2.bf16.msra.mxu0 0
    %1314 = vmatprep.subr.bf16.mxu0 0
    %1315 = vmatpush2.bf16.msra.mxu0 0
    %1316 = vmatprep.subr.bf16.mxu0 0
    %1317 = vmatpush2.bf16.msra.mxu0 0
    %1318 = vmatprep.subr.bf16.mxu0 0
    %1319 = vmatpush2.bf16.msra.mxu0 0
    %1320 = vmatprep.subr.bf16.mxu0 0
    %1321 = vmatpush2.bf16.msra.mxu0 0
    %1322 = vmatprep.mubr.bf16.mxu0 0
    %1323 = vmatmul.mubr.bf16.gmra.mxu0 %v1289
    %v1324 = vpop.f32.mrf.mxu0
    %v1325 = vadd.f32 %v782, %v1324
    %v1326 = vpop.f32.mrf.mxu0
    %v1327 = vpop.f32.mrf.mxu0
    %v1328 = vpop.f32.mrf.mxu0
    %1329 = vdwg.mxu0
    %s1330 = scalar_lea.vmem [#allocation5], 24
    %1331 = vst [vmem:[%s1330] sm:$0xff] %v1325
    %1332 = vmatprep.subr.bf16.mxu0 %v632
    %1333 = vmatpush1.bf16.msra.mxu0 %v631
    %1334 = vmatprep.subr.bf16.mxu0 %v628
    %1335 = vmatpush1.bf16.msra.mxu0 %v627
    %1336 = vmatprep.subr.bf16.mxu0 %v624
    %1337 = vmatpush1.bf16.msra.mxu0 %v623
    %1338 = vmatprep.subr.bf16.mxu0 %v620
    %1339 = vmatpush1.bf16.msra.mxu0 %v619
    %1340 = vmatprep.subr.bf16.mxu0 %v616
    %1341 = vmatpush1.bf16.msra.mxu0 %v615
    %1342 = vmatprep.subr.bf16.mxu0 %v612
    %1343 = vmatpush1.bf16.msra.mxu0 %v611
    %1344 = vmatprep.subr.bf16.mxu0 %v608
    %1345 = vmatpush1.bf16.msra.mxu0 %v607
    %1346 = vmatprep.subr.bf16.mxu0 %v604
    %1347 = vmatpush1.bf16.msra.mxu0 %v603
    %1348 = vmatprep.subr.bf16.mxu0 0
    %1349 = vmatpush2.bf16.msra.mxu0 0
    %1350 = vmatprep.subr.bf16.mxu0 0
    %1351 = vmatpush2.bf16.msra.mxu0 0
    %1352 = vmatprep.subr.bf16.mxu0 0
    %1353 = vmatpush2.bf16.msra.mxu0 0
    %1354 = vmatprep.subr.bf16.mxu0 0
    %1355 = vmatpush2.bf16.msra.mxu0 0
    %1356 = vmatprep.subr.bf16.mxu0 0
    %1357 = vmatpush2.bf16.msra.mxu0 0
    %1358 = vmatprep.subr.bf16.mxu0 0
    %1359 = vmatpush2.bf16.msra.mxu0 0
    %1360 = vmatprep.subr.bf16.mxu0 0
    %1361 = vmatpush2.bf16.msra.mxu0 0
    %1362 = vmatprep.subr.bf16.mxu0 0
    %1363 = vmatpush2.bf16.msra.mxu0 0
    %1364 = vmatprep.mubr.bf16.mxu0 0
    %1365 = vmatmul.mubr.bf16.gmra.mxu0 %v1289
    %v1366 = vpop.f32.mrf.mxu0
    %v1367 = vadd.f32 0.0, %v1366
    %v1368 = vpop.f32.mrf.mxu0
    %v1369 = vadd.f32 0.0, %v1368
    %v1370 = vpop.f32.mrf.mxu0
    %v1371 = vpop.f32.mrf.mxu0
    %1372 = vdwg.mxu0
    %1373 = vmatprep.subr.bf16.mxu0 %v634
    %1374 = vmatpush1.bf16.msra.mxu0 %v633
    %1375 = vmatprep.subr.bf16.mxu0 %v630
    %1376 = vmatpush1.bf16.msra.mxu0 %v629
    %1377 = vmatprep.subr.bf16.mxu0 %v626
    %1378 = vmatpush1.bf16.msra.mxu0 %v625
    %1379 = vmatprep.subr.bf16.mxu0 %v622
    %1380 = vmatpush1.bf16.msra.mxu0 %v621
    %1381 = vmatprep.subr.bf16.mxu0 %v618
    %1382 = vmatpush1.bf16.msra.mxu0 %v617
    %1383 = vmatprep.subr.bf16.mxu0 %v614
    %1384 = vmatpush1.bf16.msra.mxu0 %v613
    %1385 = vmatprep.subr.bf16.mxu0 %v610
    %1386 = vmatpush1.bf16.msra.mxu0 %v609
    %1387 = vmatprep.subr.bf16.mxu0 %v606
    %1388 = vmatpush1.bf16.msra.mxu0 %v605
    %1389 = vmatprep.subr.bf16.mxu0 0
    %1390 = vmatpush2.bf16.msra.mxu0 0
    %1391 = vmatprep.subr.bf16.mxu0 0
    %1392 = vmatpush2.bf16.msra.mxu0 0
    %1393 = vmatprep.subr.bf16.mxu0 0
    %1394 = vmatpush2.bf16.msra.mxu0 0
    %1395 = vmatprep.subr.bf16.mxu0 0
    %1396 = vmatpush2.bf16.msra.mxu0 0
    %1397 = vmatprep.subr.bf16.mxu0 0
    %1398 = vmatpush2.bf16.msra.mxu0 0
    %1399 = vmatprep.subr.bf16.mxu0 0
    %1400 = vmatpush2.bf16.msra.mxu0 0
    %1401 = vmatprep.subr.bf16.mxu0 0
    %1402 = vmatpush2.bf16.msra.mxu0 0
    %1403 = vmatprep.subr.bf16.mxu0 0
    %1404 = vmatpush2.bf16.msra.mxu0 0
    %1405 = vmatprep.mubr.bf16.mxu0 0
    %1406 = vmatmul.mubr.bf16.gmra.mxu0 %v1289
    %v1407 = vpop.f32.mrf.mxu0
    %v1408 = vadd.f32 0.0, %v1407
    %v1409 = vpop.f32.mrf.mxu0
    %v1410 = vadd.f32 0.0, %v1409
    %v1411 = vpop.f32.mrf.mxu0
    %v1412 = vpop.f32.mrf.mxu0
    %1413 = vdwg.mxu0
    %v1414 = vadd.f32 %v367, %v1367
    %v1415 = vadd.f32 %v369, %v1369
    %v1416 = vadd.f32 %v440, %v1408
    %v1417 = vadd.f32 %v442, %v1410
    %v1418 = vxor.u32 %v1414, 2147483648
    %v1419 = vmul.f32 %v1418, 1.442695
    %v1420 = vpow.pop %v1419
    %v1421 = vadd.f32 %v1420, 1.0
    %v1422 = vrcp.pop %v1421
    %v1423 = vmul.f32 1.0, %v1422
    %v1424 = vxor.u32 %v1415, 2147483648
    %v1425 = vmul.f32 %v1424, 1.442695
    %v1426 = vpow.pop %v1425
    %v1427 = vadd.f32 %v1426, 1.0
    %v1428 = vrcp.pop %v1427
    %v1429 = vmul.f32 1.0, %v1428
    %v1430 = vtanh.pop %v1416
    %v1431 = vxor.u32 %v1417, 2147483648
    %v1432 = vmul.f32 %v1431, 1.442695
    %v1433 = vpow.pop %v1432
    %v1434 = vadd.f32 %v1433, 1.0
    %v1435 = vrcp.pop %v1434
    %v1436 = vmul.f32 1.0, %v1435
    %v1437 = vmul.f32 %v1429, %v1286
    %v1438 = vmul.f32 %v1423, %v1430
    %v1439 = vadd.f32 %v1437, %v1438
    %v1440 = vtanh.pop %v1439
    %v1441 = vmul.f32 %v1436, %v1440
    %v1442 = vpack.c.bf16 %v1441, %v1441
    %1443 = vmatprep.subr.bf16.mxu0 0
    %1444 = vmatpush1.bf16.msra.mxu0 %v823
    %1445 = vmatprep.subr.bf16.mxu0 0
    %1446 = vmatpush1.bf16.msra.mxu0 %v822
    %1447 = vmatprep.subr.bf16.mxu0 0
    %1448 = vmatpush1.bf16.msra.mxu0 %v821
    %1449 = vmatprep.subr.bf16.mxu0 0
    %1450 = vmatpush1.bf16.msra.mxu0 %v820
    %1451 = vmatprep.subr.bf16.mxu0 0
    %1452 = vmatpush1.bf16.msra.mxu0 %v819
    %1453 = vmatprep.subr.bf16.mxu0 0
    %1454 = vmatpush1.bf16.msra.mxu0 %v818
    %1455 = vmatprep.subr.bf16.mxu0 0
    %1456 = vmatpush1.bf16.msra.mxu0 %v817
    %1457 = vmatprep.subr.bf16.mxu0 0
    %1458 = vmatpush1.bf16.msra.mxu0 %v816
    %1459 = vmatprep.subr.bf16.mxu0 0
    %1460 = vmatpush2.bf16.msra.mxu0 0
    %1461 = vmatprep.subr.bf16.mxu0 0
    %1462 = vmatpush2.bf16.msra.mxu0 0
    %1463 = vmatprep.subr.bf16.mxu0 0
    %1464 = vmatpush2.bf16.msra.mxu0 0
    %1465 = vmatprep.subr.bf16.mxu0 0
    %1466 = vmatpush2.bf16.msra.mxu0 0
    %1467 = vmatprep.subr.bf16.mxu0 0
    %1468 = vmatpush2.bf16.msra.mxu0 0
    %1469 = vmatprep.subr.bf16.mxu0 0
    %1470 = vmatpush2.bf16.msra.mxu0 0
    %1471 = vmatprep.subr.bf16.mxu0 0
    %1472 = vmatpush2.bf16.msra.mxu0 0
    %1473 = vmatprep.subr.bf16.mxu0 0
    %1474 = vmatpush2.bf16.msra.mxu0 0
    %1475 = vmatprep.mubr.bf16.mxu0 0
    %1476 = vmatmul.mubr.bf16.gmra.mxu0 %v1442
    %v1477 = vpop.f32.mrf.mxu0
    %v1478 = vadd.f32 %v782, %v1477
    %v1479 = vpop.f32.mrf.mxu0
    %v1480 = vpop.f32.mrf.mxu0
    %v1481 = vpop.f32.mrf.mxu0
    %1482 = vdwg.mxu0
    %s1483 = scalar_lea.vmem [#allocation5], 32
    %1484 = vst [vmem:[%s1483] sm:$0xff] %v1478
    %1485 = vmatprep.subr.bf16.mxu0 %v632
    %1486 = vmatpush1.bf16.msra.mxu0 %v631
    %1487 = vmatprep.subr.bf16.mxu0 %v628
    %1488 = vmatpush1.bf16.msra.mxu0 %v627
    %1489 = vmatprep.subr.bf16.mxu0 %v624
    %1490 = vmatpush1.bf16.msra.mxu0 %v623
    %1491 = vmatprep.subr.bf16.mxu0 %v620
    %1492 = vmatpush1.bf16.msra.mxu0 %v619
    %1493 = vmatprep.subr.bf16.mxu0 %v616
    %1494 = vmatpush1.bf16.msra.mxu0 %v615
    %1495 = vmatprep.subr.bf16.mxu0 %v612
    %1496 = vmatpush1.bf16.msra.mxu0 %v611
    %1497 = vmatprep.subr.bf16.mxu0 %v608
    %1498 = vmatpush1.bf16.msra.mxu0 %v607
    %1499 = vmatprep.subr.bf16.mxu0 %v604
    %1500 = vmatpush1.bf16.msra.mxu0 %v603
    %1501 = vmatprep.subr.bf16.mxu0 0
    %1502 = vmatpush2.bf16.msra.mxu0 0
    %1503 = vmatprep.subr.bf16.mxu0 0
    %1504 = vmatpush2.bf16.msra.mxu0 0
    %1505 = vmatprep.subr.bf16.mxu0 0
    %1506 = vmatpush2.bf16.msra.mxu0 0
    %1507 = vmatprep.subr.bf16.mxu0 0
    %1508 = vmatpush2.bf16.msra.mxu0 0
    %1509 = vmatprep.subr.bf16.mxu0 0
    %1510 = vmatpush2.bf16.msra.mxu0 0
    %1511 = vmatprep.subr.bf16.mxu0 0
    %1512 = vmatpush2.bf16.msra.mxu0 0
    %1513 = vmatprep.subr.bf16.mxu0 0
    %1514 = vmatpush2.bf16.msra.mxu0 0
    %1515 = vmatprep.subr.bf16.mxu0 0
    %1516 = vmatpush2.bf16.msra.mxu0 0
    %1517 = vmatprep.mubr.bf16.mxu0 0
    %1518 = vmatmul.mubr.bf16.gmra.mxu0 %v1442
    %v1519 = vpop.f32.mrf.mxu0
    %v1520 = vadd.f32 0.0, %v1519
    %v1521 = vpop.f32.mrf.mxu0
    %v1522 = vadd.f32 0.0, %v1521
    %v1523 = vpop.f32.mrf.mxu0
    %v1524 = vpop.f32.mrf.mxu0
    %1525 = vdwg.mxu0
    %1526 = vmatprep.subr.bf16.mxu0 %v634
    %1527 = vmatpush1.bf16.msra.mxu0 %v633
    %1528 = vmatprep.subr.bf16.mxu0 %v630
    %1529 = vmatpush1.bf16.msra.mxu0 %v629
    %1530 = vmatprep.subr.bf16.mxu0 %v626
    %1531 = vmatpush1.bf16.msra.mxu0 %v625
    %1532 = vmatprep.subr.bf16.mxu0 %v622
    %1533 = vmatpush1.bf16.msra.mxu0 %v621
    %1534 = vmatprep.subr.bf16.mxu0 %v618
    %1535 = vmatpush1.bf16.msra.mxu0 %v617
    %1536 = vmatprep.subr.bf16.mxu0 %v614
    %1537 = vmatpush1.bf16.msra.mxu0 %v613
    %1538 = vmatprep.subr.bf16.mxu0 %v610
    %1539 = vmatpush1.bf16.msra.mxu0 %v609
    %1540 = vmatprep.subr.bf16.mxu0 %v606
    %1541 = vmatpush1.bf16.msra.mxu0 %v605
    %1542 = vmatprep.subr.bf16.mxu0 0
    %1543 = vmatpush2.bf16.msra.mxu0 0
    %1544 = vmatprep.subr.bf16.mxu0 0
    %1545 = vmatpush2.bf16.msra.mxu0 0
    %1546 = vmatprep.subr.bf16.mxu0 0
    %1547 = vmatpush2.bf16.msra.mxu0 0
    %1548 = vmatprep.subr.bf16.mxu0 0
    %1549 = vmatpush2.bf16.msra.mxu0 0
    %1550 = vmatprep.subr.bf16.mxu0 0
    %1551 = vmatpush2.bf16.msra.mxu0 0
    %1552 = vmatprep.subr.bf16.mxu0 0
    %1553 = vmatpush2.bf16.msra.mxu0 0
    %1554 = vmatprep.subr.bf16.mxu0 0
    %1555 = vmatpush2.bf16.msra.mxu0 0
    %1556 = vmatprep.subr.bf16.mxu0 0
    %1557 = vmatpush2.bf16.msra.mxu0 0
    %1558 = vmatprep.mubr.bf16.mxu0 0
    %1559 = vmatmul.mubr.bf16.gmra.mxu0 %v1442
    %v1560 = vpop.f32.mrf.mxu0
    %v1561 = vadd.f32 0.0, %v1560
    %v1562 = vpop.f32.mrf.mxu0
    %v1563 = vadd.f32 0.0, %v1562
    %v1564 = vpop.f32.mrf.mxu0
    %v1565 = vpop.f32.mrf.mxu0
    %1566 = vdwg.mxu0
    %v1567 = vadd.f32 %v371, %v1520
    %v1568 = vadd.f32 %v373, %v1522
    %v1569 = vadd.f32 %v444, %v1561
    %v1570 = vadd.f32 %v446, %v1563
    %v1571 = vxor.u32 %v1567, 2147483648
    %v1572 = vmul.f32 %v1571, 1.442695
    %v1573 = vpow.pop %v1572
    %v1574 = vadd.f32 %v1573, 1.0
    %v1575 = vrcp.pop %v1574
    %v1576 = vmul.f32 1.0, %v1575
    %v1577 = vxor.u32 %v1568, 2147483648
    %v1578 = vmul.f32 %v1577, 1.442695
    %v1579 = vpow.pop %v1578
    %v1580 = vadd.f32 %v1579, 1.0
    %v1581 = vrcp.pop %v1580
    %v1582 = vmul.f32 1.0, %v1581
    %v1583 = vtanh.pop %v1569
    %v1584 = vxor.u32 %v1570, 2147483648
    %v1585 = vmul.f32 %v1584, 1.442695
    %v1586 = vpow.pop %v1585
    %v1587 = vadd.f32 %v1586, 1.0
    %v1588 = vrcp.pop %v1587
    %v1589 = vmul.f32 1.0, %v1588
    %v1590 = vmul.f32 %v1582, %v1439
    %v1591 = vmul.f32 %v1576, %v1583
    %v1592 = vadd.f32 %v1590, %v1591
    %v1593 = vtanh.pop %v1592
    %v1594 = vmul.f32 %v1589, %v1593
    %v1595 = vpack.c.bf16 %v1594, %v1594
    %1596 = vmatprep.subr.bf16.mxu0 0
    %1597 = vmatpush1.bf16.msra.mxu0 %v823
    %1598 = vmatprep.subr.bf16.mxu0 0
    %1599 = vmatpush1.bf16.msra.mxu0 %v822
    %1600 = vmatprep.subr.bf16.mxu0 0
    %1601 = vmatpush1.bf16.msra.mxu0 %v821
    %1602 = vmatprep.subr.bf16.mxu0 0
    %1603 = vmatpush1.bf16.msra.mxu0 %v820
    %1604 = vmatprep.subr.bf16.mxu0 0
    %1605 = vmatpush1.bf16.msra.mxu0 %v819
    %1606 = vmatprep.subr.bf16.mxu0 0
    %1607 = vmatpush1.bf16.msra.mxu0 %v818
    %1608 = vmatprep.subr.bf16.mxu0 0
    %1609 = vmatpush1.bf16.msra.mxu0 %v817
    %1610 = vmatprep.subr.bf16.mxu0 0
    %1611 = vmatpush1.bf16.msra.mxu0 %v816
    %1612 = vmatprep.subr.bf16.mxu0 0
    %1613 = vmatpush2.bf16.msra.mxu0 0
    %1614 = vmatprep.subr.bf16.mxu0 0
    %1615 = vmatpush2.bf16.msra.mxu0 0
    %1616 = vmatprep.subr.bf16.mxu0 0
    %1617 = vmatpush2.bf16.msra.mxu0 0
    %1618 = vmatprep.subr.bf16.mxu0 0
    %1619 = vmatpush2.bf16.msra.mxu0 0
    %1620 = vmatprep.subr.bf16.mxu0 0
    %1621 = vmatpush2.bf16.msra.mxu0 0
    %1622 = vmatprep.subr.bf16.mxu0 0
    %1623 = vmatpush2.bf16.msra.mxu0 0
    %1624 = vmatprep.subr.bf16.mxu0 0
    %1625 = vmatpush2.bf16.msra.mxu0 0
    %1626 = vmatprep.subr.bf16.mxu0 0
    %1627 = vmatpush2.bf16.msra.mxu0 0
    %1628 = vmatprep.mubr.bf16.mxu0 0
    %1629 = vmatmul.mubr.bf16.gmra.mxu0 %v1595
    %v1630 = vpop.f32.mrf.mxu0
    %v1631 = vadd.f32 %v782, %v1630
    %v1632 = vpop.f32.mrf.mxu0
    %v1633 = vpop.f32.mrf.mxu0
    %v1634 = vpop.f32.mrf.mxu0
    %1635 = vdwg.mxu0
    %s1636 = scalar_lea.vmem [#allocation5], 40
    %1637 = vst [vmem:[%s1636] sm:$0xff] %v1631
    %1638 = vmatprep.subr.bf16.mxu0 %v632
    %1639 = vmatpush1.bf16.msra.mxu0 %v631
    %1640 = vmatprep.subr.bf16.mxu0 %v628
    %1641 = vmatpush1.bf16.msra.mxu0 %v627
    %1642 = vmatprep.subr.bf16.mxu0 %v624
    %1643 = vmatpush1.bf16.msra.mxu0 %v623
    %1644 = vmatprep.subr.bf16.mxu0 %v620
    %1645 = vmatpush1.bf16.msra.mxu0 %v619
    %1646 = vmatprep.subr.bf16.mxu0 %v616
    %1647 = vmatpush1.bf16.msra.mxu0 %v615
    %1648 = vmatprep.subr.bf16.mxu0 %v612
    %1649 = vmatpush1.bf16.msra.mxu0 %v611
    %1650 = vmatprep.subr.bf16.mxu0 %v608
    %1651 = vmatpush1.bf16.msra.mxu0 %v607
    %1652 = vmatprep.subr.bf16.mxu0 %v604
    %1653 = vmatpush1.bf16.msra.mxu0 %v603
    %1654 = vmatprep.subr.bf16.mxu0 0
    %1655 = vmatpush2.bf16.msra.mxu0 0
    %1656 = vmatprep.subr.bf16.mxu0 0
    %1657 = vmatpush2.bf16.msra.mxu0 0
    %1658 = vmatprep.subr.bf16.mxu0 0
    %1659 = vmatpush2.bf16.msra.mxu0 0
    %1660 = vmatprep.subr.bf16.mxu0 0
    %1661 = vmatpush2.bf16.msra.mxu0 0
    %1662 = vmatprep.subr.bf16.mxu0 0
    %1663 = vmatpush2.bf16.msra.mxu0 0
    %1664 = vmatprep.subr.bf16.mxu0 0
    %1665 = vmatpush2.bf16.msra.mxu0 0
    %1666 = vmatprep.subr.bf16.mxu0 0
    %1667 = vmatpush2.bf16.msra.mxu0 0
    %1668 = vmatprep.subr.bf16.mxu0 0
    %1669 = vmatpush2.bf16.msra.mxu0 0
    %1670 = vmatprep.mubr.bf16.mxu0 0
    %1671 = vmatmul.mubr.bf16.gmra.mxu0 %v1595
    %v1672 = vpop.f32.mrf.mxu0
    %v1673 = vadd.f32 0.0, %v1672
    %v1674 = vpop.f32.mrf.mxu0
    %v1675 = vadd.f32 0.0, %v1674
    %v1676 = vpop.f32.mrf.mxu0
    %v1677 = vpop.f32.mrf.mxu0
    %1678 = vdwg.mxu0
    %1679 = vmatprep.subr.bf16.mxu0 %v634
    %1680 = vmatpush1.bf16.msra.mxu0 %v633
    %1681 = vmatprep.subr.bf16.mxu0 %v630
    %1682 = vmatpush1.bf16.msra.mxu0 %v629
    %1683 = vmatprep.subr.bf16.mxu0 %v626
    %1684 = vmatpush1.bf16.msra.mxu0 %v625
    %1685 = vmatprep.subr.bf16.mxu0 %v622
    %1686 = vmatpush1.bf16.msra.mxu0 %v621
    %1687 = vmatprep.subr.bf16.mxu0 %v618
    %1688 = vmatpush1.bf16.msra.mxu0 %v617
    %1689 = vmatprep.subr.bf16.mxu0 %v614
    %1690 = vmatpush1.bf16.msra.mxu0 %v613
    %1691 = vmatprep.subr.bf16.mxu0 %v610
    %1692 = vmatpush1.bf16.msra.mxu0 %v609
    %1693 = vmatprep.subr.bf16.mxu0 %v606
    %1694 = vmatpush1.bf16.msra.mxu0 %v605
    %1695 = vmatprep.subr.bf16.mxu0 0
    %1696 = vmatpush2.bf16.msra.mxu0 0
    %1697 = vmatprep.subr.bf16.mxu0 0
    %1698 = vmatpush2.bf16.msra.mxu0 0
    %1699 = vmatprep.subr.bf16.mxu0 0
    %1700 = vmatpush2.bf16.msra.mxu0 0
    %1701 = vmatprep.subr.bf16.mxu0 0
    %1702 = vmatpush2.bf16.msra.mxu0 0
    %1703 = vmatprep.subr.bf16.mxu0 0
    %1704 = vmatpush2.bf16.msra.mxu0 0
    %1705 = vmatprep.subr.bf16.mxu0 0
    %1706 = vmatpush2.bf16.msra.mxu0 0
    %1707 = vmatprep.subr.bf16.mxu0 0
    %1708 = vmatpush2.bf16.msra.mxu0 0
    %1709 = vmatprep.subr.bf16.mxu0 0
    %1710 = vmatpush2.bf16.msra.mxu0 0
    %1711 = vmatprep.mubr.bf16.mxu0 0
    %1712 = vmatmul.mubr.bf16.gmra.mxu0 %v1595
    %v1713 = vpop.f32.mrf.mxu0
    %v1714 = vadd.f32 0.0, %v1713
    %v1715 = vpop.f32.mrf.mxu0
    %v1716 = vadd.f32 0.0, %v1715
    %v1717 = vpop.f32.mrf.mxu0
    %v1718 = vpop.f32.mrf.mxu0
    %1719 = vdwg.mxu0
    %v1720 = vadd.f32 %v377, %v1673
    %v1721 = vadd.f32 %v379, %v1675
    %v1722 = vadd.f32 %v450, %v1714
    %v1723 = vadd.f32 %v452, %v1716
    %v1724 = vxor.u32 %v1720, 2147483648
    %v1725 = vmul.f32 %v1724, 1.442695
    %v1726 = vpow.pop %v1725
    %v1727 = vadd.f32 %v1726, 1.0
    %v1728 = vrcp.pop %v1727
    %v1729 = vmul.f32 1.0, %v1728
    %v1730 = vxor.u32 %v1721, 2147483648
    %v1731 = vmul.f32 %v1730, 1.442695
    %v1732 = vpow.pop %v1731
    %v1733 = vadd.f32 %v1732, 1.0
    %v1734 = vrcp.pop %v1733
    %v1735 = vmul.f32 1.0, %v1734
    %v1736 = vtanh.pop %v1722
    %v1737 = vxor.u32 %v1723, 2147483648
    %v1738 = vmul.f32 %v1737, 1.442695
    %v1739 = vpow.pop %v1738
    %v1740 = vadd.f32 %v1739, 1.0
    %v1741 = vrcp.pop %v1740
    %v1742 = vmul.f32 1.0, %v1741
    %v1743 = vmul.f32 %v1735, %v1592
    %v1744 = vmul.f32 %v1729, %v1736
    %v1745 = vadd.f32 %v1743, %v1744
    %v1746 = vtanh.pop %v1745
    %v1747 = vmul.f32 %v1742, %v1746
    %v1748 = vpack.c.bf16 %v1747, %v1747
    %1749 = vmatprep.subr.bf16.mxu0 0
    %1750 = vmatpush1.bf16.msra.mxu0 %v823
    %1751 = vmatprep.subr.bf16.mxu0 0
    %1752 = vmatpush1.bf16.msra.mxu0 %v822
    %1753 = vmatprep.subr.bf16.mxu0 0
    %1754 = vmatpush1.bf16.msra.mxu0 %v821
    %1755 = vmatprep.subr.bf16.mxu0 0
    %1756 = vmatpush1.bf16.msra.mxu0 %v820
    %1757 = vmatprep.subr.bf16.mxu0 0
    %1758 = vmatpush1.bf16.msra.mxu0 %v819
    %1759 = vmatprep.subr.bf16.mxu0 0
    %1760 = vmatpush1.bf16.msra.mxu0 %v818
    %1761 = vmatprep.subr.bf16.mxu0 0
    %1762 = vmatpush1.bf16.msra.mxu0 %v817
    %1763 = vmatprep.subr.bf16.mxu0 0
    %1764 = vmatpush1.bf16.msra.mxu0 %v816
    %1765 = vmatprep.subr.bf16.mxu0 0
    %1766 = vmatpush2.bf16.msra.mxu0 0
    %1767 = vmatprep.subr.bf16.mxu0 0
    %1768 = vmatpush2.bf16.msra.mxu0 0
    %1769 = vmatprep.subr.bf16.mxu0 0
    %1770 = vmatpush2.bf16.msra.mxu0 0
    %1771 = vmatprep.subr.bf16.mxu0 0
    %1772 = vmatpush2.bf16.msra.mxu0 0
    %1773 = vmatprep.subr.bf16.mxu0 0
    %1774 = vmatpush2.bf16.msra.mxu0 0
    %1775 = vmatprep.subr.bf16.mxu0 0
    %1776 = vmatpush2.bf16.msra.mxu0 0
    %1777 = vmatprep.subr.bf16.mxu0 0
    %1778 = vmatpush2.bf16.msra.mxu0 0
    %1779 = vmatprep.subr.bf16.mxu0 0
    %1780 = vmatpush2.bf16.msra.mxu0 0
    %1781 = vmatprep.mubr.bf16.mxu0 0
    %1782 = vmatmul.mubr.bf16.gmra.mxu0 %v1748
    %v1783 = vpop.f32.mrf.mxu0
    %v1784 = vadd.f32 %v782, %v1783
    %v1785 = vpop.f32.mrf.mxu0
    %v1786 = vpop.f32.mrf.mxu0
    %v1787 = vpop.f32.mrf.mxu0
    %1788 = vdwg.mxu0
    %s1789 = scalar_lea.vmem [#allocation5], 48
    %1790 = vst [vmem:[%s1789] sm:$0xff] %v1784
    %1791 = vmatprep.subr.bf16.mxu0 %v632
    %1792 = vmatpush1.bf16.msra.mxu0 %v631
    %1793 = vmatprep.subr.bf16.mxu0 %v628
    %1794 = vmatpush1.bf16.msra.mxu0 %v627
    %1795 = vmatprep.subr.bf16.mxu0 %v624
    %1796 = vmatpush1.bf16.msra.mxu0 %v623
    %1797 = vmatprep.subr.bf16.mxu0 %v620
    %1798 = vmatpush1.bf16.msra.mxu0 %v619
    %1799 = vmatprep.subr.bf16.mxu0 %v616
    %1800 = vmatpush1.bf16.msra.mxu0 %v615
    %1801 = vmatprep.subr.bf16.mxu0 %v612
    %1802 = vmatpush1.bf16.msra.mxu0 %v611
    %1803 = vmatprep.subr.bf16.mxu0 %v608
    %1804 = vmatpush1.bf16.msra.mxu0 %v607
    %1805 = vmatprep.subr.bf16.mxu0 %v604
    %1806 = vmatpush1.bf16.msra.mxu0 %v603
    %1807 = vmatprep.subr.bf16.mxu0 0
    %1808 = vmatpush2.bf16.msra.mxu0 0
    %1809 = vmatprep.subr.bf16.mxu0 0
    %1810 = vmatpush2.bf16.msra.mxu0 0
    %1811 = vmatprep.subr.bf16.mxu0 0
    %1812 = vmatpush2.bf16.msra.mxu0 0
    %1813 = vmatprep.subr.bf16.mxu0 0
    %1814 = vmatpush2.bf16.msra.mxu0 0
    %1815 = vmatprep.subr.bf16.mxu0 0
    %1816 = vmatpush2.bf16.msra.mxu0 0
    %1817 = vmatprep.subr.bf16.mxu0 0
    %1818 = vmatpush2.bf16.msra.mxu0 0
    %1819 = vmatprep.subr.bf16.mxu0 0
    %1820 = vmatpush2.bf16.msra.mxu0 0
    %1821 = vmatprep.subr.bf16.mxu0 0
    %1822 = vmatpush2.bf16.msra.mxu0 0
    %1823 = vmatprep.mubr.bf16.mxu0 0
    %1824 = vmatmul.mubr.bf16.gmra.mxu0 %v1748
    %v1825 = vpop.f32.mrf.mxu0
    %v1826 = vadd.f32 0.0, %v1825
    %v1827 = vpop.f32.mrf.mxu0
    %v1828 = vadd.f32 0.0, %v1827
    %v1829 = vpop.f32.mrf.mxu0
    %v1830 = vpop.f32.mrf.mxu0
    %1831 = vdwg.mxu0
    %1832 = vmatprep.subr.bf16.mxu0 %v634
    %1833 = vmatpush1.bf16.msra.mxu0 %v633
    %1834 = vmatprep.subr.bf16.mxu0 %v630
    %1835 = vmatpush1.bf16.msra.mxu0 %v629
    %1836 = vmatprep.subr.bf16.mxu0 %v626
    %1837 = vmatpush1.bf16.msra.mxu0 %v625
    %1838 = vmatprep.subr.bf16.mxu0 %v622
    %1839 = vmatpush1.bf16.msra.mxu0 %v621
    %1840 = vmatprep.subr.bf16.mxu0 %v618
    %1841 = vmatpush1.bf16.msra.mxu0 %v617
    %1842 = vmatprep.subr.bf16.mxu0 %v614
    %1843 = vmatpush1.bf16.msra.mxu0 %v613
    %1844 = vmatprep.subr.bf16.mxu0 %v610
    %1845 = vmatpush1.bf16.msra.mxu0 %v609
    %1846 = vmatprep.subr.bf16.mxu0 %v606
    %1847 = vmatpush1.bf16.msra.mxu0 %v605
    %1848 = vmatprep.subr.bf16.mxu0 0
    %1849 = vmatpush2.bf16.msra.mxu0 0
    %1850 = vmatprep.subr.bf16.mxu0 0
    %1851 = vmatpush2.bf16.msra.mxu0 0
    %1852 = vmatprep.subr.bf16.mxu0 0
    %1853 = vmatpush2.bf16.msra.mxu0 0
    %1854 = vmatprep.subr.bf16.mxu0 0
    %1855 = vmatpush2.bf16.msra.mxu0 0
    %1856 = vmatprep.subr.bf16.mxu0 0
    %1857 = vmatpush2.bf16.msra.mxu0 0
    %1858 = vmatprep.subr.bf16.mxu0 0
    %1859 = vmatpush2.bf16.msra.mxu0 0
    %1860 = vmatprep.subr.bf16.mxu0 0
    %1861 = vmatpush2.bf16.msra.mxu0 0
    %1862 = vmatprep.subr.bf16.mxu0 0
    %1863 = vmatpush2.bf16.msra.mxu0 0
    %1864 = vmatprep.mubr.bf16.mxu0 0
    %1865 = vmatmul.mubr.bf16.gmra.mxu0 %v1748
    %v1866 = vpop.f32.mrf.mxu0
    %v1867 = vadd.f32 0.0, %v1866
    %v1868 = vpop.f32.mrf.mxu0
    %v1869 = vadd.f32 0.0, %v1868
    %v1870 = vpop.f32.mrf.mxu0
    %v1871 = vpop.f32.mrf.mxu0
    %1872 = vdwg.mxu0
    %v1873 = vadd.f32 %v381, %v1826
    %v1874 = vadd.f32 %v383, %v1828
    %v1875 = vadd.f32 %v454, %v1867
    %v1876 = vadd.f32 %v456, %v1869
    %v1877 = vxor.u32 %v1873, 2147483648
    %v1878 = vmul.f32 %v1877, 1.442695
    %v1879 = vpow.pop %v1878
    %v1880 = vadd.f32 %v1879, 1.0
    %v1881 = vrcp.pop %v1880
    %v1882 = vmul.f32 1.0, %v1881
    %v1883 = vxor.u32 %v1874, 2147483648
    %v1884 = vmul.f32 %v1883, 1.442695
    %v1885 = vpow.pop %v1884
    %v1886 = vadd.f32 %v1885, 1.0
    %v1887 = vrcp.pop %v1886
    %v1888 = vmul.f32 1.0, %v1887
    %v1889 = vtanh.pop %v1875
    %v1890 = vxor.u32 %v1876, 2147483648
    %v1891 = vmul.f32 %v1890, 1.442695
    %v1892 = vpow.pop %v1891
    %v1893 = vadd.f32 %v1892, 1.0
    %v1894 = vrcp.pop %v1893
    %v1895 = vmul.f32 1.0, %v1894
    %v1896 = vmul.f32 %v1888, %v1745
    %v1897 = vmul.f32 %v1882, %v1889
    %v1898 = vadd.f32 %v1896, %v1897
    %v1899 = vtanh.pop %v1898
    %v1900 = vmul.f32 %v1895, %v1899
    %v1901 = vpack.c.bf16 %v1900, %v1900
    %1902 = vmatprep.subr.bf16.mxu0 0
    %1903 = vmatpush1.bf16.msra.mxu0 %v823
    %1904 = vmatprep.subr.bf16.mxu0 0
    %1905 = vmatpush1.bf16.msra.mxu0 %v822
    %1906 = vmatprep.subr.bf16.mxu0 0
    %1907 = vmatpush1.bf16.msra.mxu0 %v821
    %1908 = vmatprep.subr.bf16.mxu0 0
    %1909 = vmatpush1.bf16.msra.mxu0 %v820
    %1910 = vmatprep.subr.bf16.mxu0 0
    %1911 = vmatpush1.bf16.msra.mxu0 %v819
    %1912 = vmatprep.subr.bf16.mxu0 0
    %1913 = vmatpush1.bf16.msra.mxu0 %v818
    %1914 = vmatprep.subr.bf16.mxu0 0
    %1915 = vmatpush1.bf16.msra.mxu0 %v817
    %1916 = vmatprep.subr.bf16.mxu0 0
    %1917 = vmatpush1.bf16.msra.mxu0 %v816
    %1918 = vmatprep.subr.bf16.mxu0 0
    %1919 = vmatpush2.bf16.msra.mxu0 0
    %1920 = vmatprep.subr.bf16.mxu0 0
    %1921 = vmatpush2.bf16.msra.mxu0 0
    %1922 = vmatprep.subr.bf16.mxu0 0
    %1923 = vmatpush2.bf16.msra.mxu0 0
    %1924 = vmatprep.subr.bf16.mxu0 0
    %1925 = vmatpush2.bf16.msra.mxu0 0
    %1926 = vmatprep.subr.bf16.mxu0 0
    %1927 = vmatpush2.bf16.msra.mxu0 0
    %1928 = vmatprep.subr.bf16.mxu0 0
    %1929 = vmatpush2.bf16.msra.mxu0 0
    %1930 = vmatprep.subr.bf16.mxu0 0
    %1931 = vmatpush2.bf16.msra.mxu0 0
    %1932 = vmatprep.subr.bf16.mxu0 0
    %1933 = vmatpush2.bf16.msra.mxu0 0
    %1934 = vmatprep.mubr.bf16.mxu0 0
    %1935 = vmatmul.mubr.bf16.gmra.mxu0 %v1901
    %v1936 = vpop.f32.mrf.mxu0
    %v1937 = vadd.f32 %v782, %v1936
    %v1938 = vpop.f32.mrf.mxu0
    %v1939 = vpop.f32.mrf.mxu0
    %v1940 = vpop.f32.mrf.mxu0
    %1941 = vdwg.mxu0
    %s1942 = scalar_lea.vmem [#allocation5], 56
    %1943 = vst [vmem:[%s1942] sm:$0xff] %v1937
    // Predicated region
    $region34: #{tpu_custom_call.1} parent=1 // pred_check
      _
    $region35: #{tpu_custom_call.1} parent=1 // pred_check_branch
      %1945 = sbr.rel (0) target = $region37
    $region36: #{tpu_custom_call.1} parent=1 // pred_region
      %s1947 = ssub.s32 1024, 1024
      %1948 = vsyncadd [#allocation4], %s1947
      %s1949 = sshll.u32 [#allocation5], 4
      %s1950 = int_to_ptr.vmem [resolvable:$true] %s1949
      %1955 = dma.vmem_to_hbm [thread:$0]  %s1950, 1024, %s7, [#allocation4], 128, 128, 8
    $region37: #{tpu_custom_call.1} parent=1 // pred_fallthru
      _
    // Predicated region
    $region38: #{tpu_custom_call.1} parent=1 // pred_check
      _
    $region39: #{tpu_custom_call.1} parent=1 // pred_check_branch
      %1957 = sbr.rel (0) target = $region41
    $region40: #{tpu_custom_call.1} parent=1 // pred_region
      %1958 = dma.done [#allocation4], 1024
    $region41: #{tpu_custom_call.1} parent=1 // pred_fallthru
      _
    %1959 = vsyncpa [#allocation3], 1
    %1960 = vsyncpa [#allocation4], 1

</llo_original>
